<compile_context>
chip_gen: v7x
topology: tpu7x:2x2x1
jax: 0.10.0
libtpu: 0.0.40
codegen_flags: <defaults>
</compile_context>

<pallas_src>
import functools

import numpy as np
import jax
import jax.numpy as jnp
from jax import lax
from jax.experimental import pallas as pl
from jax.experimental.pallas import tpu as pltpu


def _mhsa_kernel(x_ref, w_ref, o_ref, *, n_heads, dim_k, dim_v):
    # x_ref: (1, n, dim_in) tile for batch b
    # w_ref: (dim_in, 2*dim_k + dim_v) resident fused [Wq*scale | Wk | Wv] slab
    # o_ref: (1, n, dim_v) lane-dense output tile for batch b
    dk = dim_k // n_heads
    dv = dim_v // n_heads

    x = x_ref[0]              # (n, dim_in), input dtype
    w = w_ref[...]            # (dim_in, 2*dim_k + dim_v), input dtype

    # Fused QKV projection: one full-width MXU matmul, f32 accumulation.
    qkv = jnp.dot(x, w, preferred_element_type=jnp.float32)  # (n, 2*dim_k + dim_v)
    qkv = qkv.astype(x.dtype)          # keep subsequent MXU operands in input dtype
    q = qkv[:, :dim_k]                 # scale already folded into W_q
    k = qkv[:, dim_k:2 * dim_k]
    v = qkv[:, 2 * dim_k:]

    outs = []
    for h in range(n_heads):           # static, small head count
        qh = q[:, h * dk:(h + 1) * dk]
        kh = k[:, h * dk:(h + 1) * dk]
        vh = v[:, h * dv:(h + 1) * dv]

        # q @ k^T without materializing a transpose: contract on dim 1 of both.
        s = lax.dot_general(qh, kh, (((1,), (1,)), ((), ())),
                            preferred_element_type=jnp.float32)    # (n, n) f32

        # Numerically-stable softmax in f32; reciprocal on the EUP.
        s = s - jnp.max(s, axis=-1, keepdims=True)
        p = jnp.exp(s)
        p = p * pl.reciprocal(jnp.sum(p, axis=-1, keepdims=True), approx=True)

        outs.append(jnp.dot(p.astype(x.dtype), vh,
                            preferred_element_type=jnp.float32))   # (n, dv)

    # Assemble the lane-dense (n, dim_v) slab and store once.
    att = jnp.concatenate(outs, axis=-1)
    o_ref[0] = att.astype(o_ref.dtype)


def multi_head_self_attention(x, wq, wk, wv, n_heads):
    """x: (bs, n, dim_in); wq/wk: (dim_k, dim_in); wv: (dim_v, dim_in) (PyTorch Linear layout)."""
    bs, n, dim_in = x.shape
    dim_k = wq.shape[0]
    dim_v = wv.shape[0]
    assert dim_k % n_heads == 0 and dim_v % n_heads == 0
    dk = dim_k // n_heads
    scale = 1.0 / np.sqrt(dk)

    # Wrapper-side (one-time) weight prep: fold the softmax scale into W_q and
    # concatenate [Wq^T*scale | Wk^T | Wv^T] into one (dim_in, 2*dim_k+dim_v) slab.
    # Head h corresponds to columns [h*dk:(h+1)*dk] of each projection, matching
    # torch's reshape(bs, n, nh, d).transpose(1, 2).
    w_all = jnp.concatenate([(wq * scale).T, wk.T, wv.T], axis=1).astype(x.dtype)
    dim_all = 2 * dim_k + dim_v

    kernel = functools.partial(_mhsa_kernel, n_heads=n_heads,
                               dim_k=dim_k, dim_v=dim_v)

    return pl.pallas_call(
        kernel,
        out_shape=jax.ShapeDtypeStruct((bs, n, dim_v), x.dtype),
        grid_spec=pltpu.PrefetchScalarGridSpec(
            num_scalar_prefetch=0,
            grid=(bs,),
            in_specs=[
                pl.BlockSpec((1, n, dim_in), lambda b: (b, 0, 0)),
                # Constant block index -> weights stay resident, no per-step DMA.
                pl.BlockSpec((dim_in, dim_all), lambda b: (0, 0)),
            ],
            out_specs=pl.BlockSpec((1, n, dim_v), lambda b: (b, 0, 0)),
        ),
        compiler_params=pltpu.CompilerParams(
            dimension_semantics=("parallel",),        # megacore-shardable on v7x
            vmem_limit_bytes=32 * 1024 * 1024,        # tiles here are << 1 MiB
        ),
    )(x, w_all)


def _reference(x, wq, wk, wv, n_heads):
    bs, n, dim_in = x.shape
    dim_k = wq.shape[0]
    dim_v = wv.shape[0]
    dk = dim_k // n_heads
    dv = dim_v // n_heads
    q = (x @ wq.T).reshape(bs, n, n_heads, dk).transpose(0, 2, 1, 3)
    k = (x @ wk.T).reshape(bs, n, n_heads, dk).transpose(0, 2, 1, 3)
    v = (x @ wv.T).reshape(bs, n, n_heads, dv).transpose(0, 2, 1, 3)
    dist = jnp.einsum("bhqd,bhkd->bhqk", q, k) * (1.0 / np.sqrt(dk))
    dist = jax.nn.softmax(dist, axis=-1)
    att = jnp.einsum("bhqk,bhkd->bhqd", dist, v)
    return att.transpose(0, 2, 1, 3).reshape(bs, n, dim_v)


if __name__ == "__main__":
    # Small shapes consistent with the module: bs=2, seq n=8, dim_in=32, dim_k=dim_v=32, heads=8.
    bs, n, dim_in = 2, 8, 32
    dim_k, dim_v, n_heads = 32, 32, 8

    key = jax.random.PRNGKey(0)
    kx, kq, kk, kv = jax.random.split(key, 4)
    x = jax.random.normal(kx, (bs, n, dim_in), dtype=jnp.float32)
    # "nn.Linear(dim, d, bias=False)"-shaped weights: (out_features, in_features)
    wq = jax.random.normal(kq, (dim_k, dim_in), dtype=jnp.float32) * 0.1
    wk = jax.random.normal(kk, (dim_k, dim_in), dtype=jnp.float32) * 0.1
    wv = jax.random.normal(kv, (dim_v, dim_in), dtype=jnp.float32) * 0.1

    out = multi_head_self_attention(x, wq, wk, wv, n_heads)
    out = jax.block_until_ready(out)

    ref = _reference(x, wq, wk, wv, n_heads)
    # approx=True reciprocal (EUP vrcp) -> slightly relaxed tolerance.
    np.testing.assert_allclose(np.asarray(out), np.asarray(ref), rtol=5e-3, atol=1e-3)

    print("KERNEL_OK")
</pallas_src>

<mosaic_0001>
module attributes {stable_mosaic.version = 11 : i64} {
  func.func @_mhsa_kernel(%arg0: i32, %arg1: memref<1x8x32xf32, #tpu.memory_space<vmem>>, %arg2: memref<32x96xf32, #tpu.memory_space<vmem>>, %arg3: memref<1x8x32xf32, #tpu.memory_space<vmem>>) attributes {dimension_semantics = [#tpu.dimension_semantics<parallel>], iteration_bounds = array<i64: 2>, scalar_prefetch = 0 : i64, scratch_operands = 0 : i64, tpu.core_type = #tpu.core_type<tc>, window_params = [{transform_indices = @transform_0, window_bounds = array<i64: 1, 8, 32>}, {pipeline_mode = #tpu.pipeline_mode<synchronous>, transform_indices = @transform_1, window_bounds = array<i64: 32, 96>}, {transform_indices = @transform_2, window_bounds = array<i64: 1, 8, 32>}]} {
    %c0 = arith.constant 0 : index
    %c0_0 = arith.constant 0 : index
    %c0_1 = arith.constant 0 : index
    %0 = vector.load %arg1[%c0, %c0_0, %c0_1] : memref<1x8x32xf32, #tpu.memory_space<vmem>>, vector<1x8x32xf32>
    %1 = vector.shape_cast %0 : vector<1x8x32xf32> to vector<8x32xf32>
    %c0_2 = arith.constant 0 : index
    %c0_3 = arith.constant 0 : index
    %2 = vector.load %arg2[%c0_2, %c0_3] : memref<32x96xf32, #tpu.memory_space<vmem>>, vector<32x96xf32>
    %cst = arith.constant dense<0.000000e+00> : vector<8x96xf32>
    %3 = tpu.matmul %1, %2, %cst {dimension_numbers = #tpu.dot_dimension_numbers<[1], [0], [0], [1], [0, 0, 1, 1], [], []>} : vector<8x32xf32>, vector<32x96xf32>, vector<8x96xf32> -> vector<8x96xf32>
    %4 = vector.extract_strided_slice %3 {offsets = [0, 0], sizes = [8, 32], strides = [1, 1]} : vector<8x96xf32> to vector<8x32xf32>
    %5 = vector.extract_strided_slice %3 {offsets = [0, 32], sizes = [8, 32], strides = [1, 1]} : vector<8x96xf32> to vector<8x32xf32>
    %6 = vector.extract_strided_slice %3 {offsets = [0, 64], sizes = [8, 32], strides = [1, 1]} : vector<8x96xf32> to vector<8x32xf32>
    %7 = vector.extract_strided_slice %4 {offsets = [0, 0], sizes = [8, 4], strides = [1, 1]} : vector<8x32xf32> to vector<8x4xf32>
    %8 = vector.extract_strided_slice %5 {offsets = [0, 0], sizes = [8, 4], strides = [1, 1]} : vector<8x32xf32> to vector<8x4xf32>
    %9 = vector.extract_strided_slice %6 {offsets = [0, 0], sizes = [8, 4], strides = [1, 1]} : vector<8x32xf32> to vector<8x4xf32>
    %cst_4 = arith.constant dense<0.000000e+00> : vector<8x8xf32>
    %10 = tpu.matmul %7, %8, %cst_4 {dimension_numbers = #tpu.dot_dimension_numbers<[1], [1], [0], [0], [0, 0, 1, 0], [], []>} : vector<8x4xf32>, vector<8x4xf32>, vector<8x8xf32> -> vector<8x8xf32>
    %cst_5 = arith.constant dense<0xFF800000> : vector<8xf32>
    %11 = vector.multi_reduction <maximumf>, %10, %cst_5 [1] : vector<8x8xf32> to vector<8xf32>
    %12 = vector.shape_cast %11 : vector<8xf32> to vector<8x1xf32>
    %13 = vector.broadcast %12 : vector<8x1xf32> to vector<8x8xf32>
    %14 = arith.subf %10, %13 : vector<8x8xf32>
    %15 = math.exp %14 : vector<8x8xf32>
    %cst_6 = arith.constant dense<0.000000e+00> : vector<8xf32>
    %16 = vector.multi_reduction <add>, %15, %cst_6 [1] : vector<8x8xf32> to vector<8xf32>
    %17 = vector.shape_cast %16 : vector<8xf32> to vector<8x1xf32>
    %18 = tpu.reciprocal %17 {approx = true} : vector<8x1xf32> -> vector<8x1xf32>
    %19 = vector.broadcast %18 : vector<8x1xf32> to vector<8x8xf32>
    %20 = arith.mulf %15, %19 : vector<8x8xf32>
    %cst_7 = arith.constant dense<0.000000e+00> : vector<8x4xf32>
    %21 = tpu.matmul %20, %9, %cst_7 {dimension_numbers = #tpu.dot_dimension_numbers<[1], [0], [0], [1], [0, 0, 1, 1], [], []>} : vector<8x8xf32>, vector<8x4xf32>, vector<8x4xf32> -> vector<8x4xf32>
    %22 = vector.extract_strided_slice %4 {offsets = [0, 4], sizes = [8, 4], strides = [1, 1]} : vector<8x32xf32> to vector<8x4xf32>
    %23 = vector.extract_strided_slice %5 {offsets = [0, 4], sizes = [8, 4], strides = [1, 1]} : vector<8x32xf32> to vector<8x4xf32>
    %24 = vector.extract_strided_slice %6 {offsets = [0, 4], sizes = [8, 4], strides = [1, 1]} : vector<8x32xf32> to vector<8x4xf32>
    %cst_8 = arith.constant dense<0.000000e+00> : vector<8x8xf32>
    %25 = tpu.matmul %22, %23, %cst_8 {dimension_numbers = #tpu.dot_dimension_numbers<[1], [1], [0], [0], [0, 0, 1, 0], [], []>} : vector<8x4xf32>, vector<8x4xf32>, vector<8x8xf32> -> vector<8x8xf32>
    %cst_9 = arith.constant dense<0xFF800000> : vector<8xf32>
    %26 = vector.multi_reduction <maximumf>, %25, %cst_9 [1] : vector<8x8xf32> to vector<8xf32>
    %27 = vector.shape_cast %26 : vector<8xf32> to vector<8x1xf32>
    %28 = vector.broadcast %27 : vector<8x1xf32> to vector<8x8xf32>
    %29 = arith.subf %25, %28 : vector<8x8xf32>
    %30 = math.exp %29 : vector<8x8xf32>
    %cst_10 = arith.constant dense<0.000000e+00> : vector<8xf32>
    %31 = vector.multi_reduction <add>, %30, %cst_10 [1] : vector<8x8xf32> to vector<8xf32>
    %32 = vector.shape_cast %31 : vector<8xf32> to vector<8x1xf32>
    %33 = tpu.reciprocal %32 {approx = true} : vector<8x1xf32> -> vector<8x1xf32>
    %34 = vector.broadcast %33 : vector<8x1xf32> to vector<8x8xf32>
    %35 = arith.mulf %30, %34 : vector<8x8xf32>
    %cst_11 = arith.constant dense<0.000000e+00> : vector<8x4xf32>
    %36 = tpu.matmul %35, %24, %cst_11 {dimension_numbers = #tpu.dot_dimension_numbers<[1], [0], [0], [1], [0, 0, 1, 1], [], []>} : vector<8x8xf32>, vector<8x4xf32>, vector<8x4xf32> -> vector<8x4xf32>
    %37 = vector.extract_strided_slice %4 {offsets = [0, 8], sizes = [8, 4], strides = [1, 1]} : vector<8x32xf32> to vector<8x4xf32>
    %38 = vector.extract_strided_slice %5 {offsets = [0, 8], sizes = [8, 4], strides = [1, 1]} : vector<8x32xf32> to vector<8x4xf32>
    %39 = vector.extract_strided_slice %6 {offsets = [0, 8], sizes = [8, 4], strides = [1, 1]} : vector<8x32xf32> to vector<8x4xf32>
    %cst_12 = arith.constant dense<0.000000e+00> : vector<8x8xf32>
    %40 = tpu.matmul %37, %38, %cst_12 {dimension_numbers = #tpu.dot_dimension_numbers<[1], [1], [0], [0], [0, 0, 1, 0], [], []>} : vector<8x4xf32>, vector<8x4xf32>, vector<8x8xf32> -> vector<8x8xf32>
    %cst_13 = arith.constant dense<0xFF800000> : vector<8xf32>
    %41 = vector.multi_reduction <maximumf>, %40, %cst_13 [1] : vector<8x8xf32> to vector<8xf32>
    %42 = vector.shape_cast %41 : vector<8xf32> to vector<8x1xf32>
    %43 = vector.broadcast %42 : vector<8x1xf32> to vector<8x8xf32>
    %44 = arith.subf %40, %43 : vector<8x8xf32>
    %45 = math.exp %44 : vector<8x8xf32>
    %cst_14 = arith.constant dense<0.000000e+00> : vector<8xf32>
    %46 = vector.multi_reduction <add>, %45, %cst_14 [1] : vector<8x8xf32> to vector<8xf32>
    %47 = vector.shape_cast %46 : vector<8xf32> to vector<8x1xf32>
    %48 = tpu.reciprocal %47 {approx = true} : vector<8x1xf32> -> vector<8x1xf32>
    %49 = vector.broadcast %48 : vector<8x1xf32> to vector<8x8xf32>
    %50 = arith.mulf %45, %49 : vector<8x8xf32>
    %cst_15 = arith.constant dense<0.000000e+00> : vector<8x4xf32>
    %51 = tpu.matmul %50, %39, %cst_15 {dimension_numbers = #tpu.dot_dimension_numbers<[1], [0], [0], [1], [0, 0, 1, 1], [], []>} : vector<8x8xf32>, vector<8x4xf32>, vector<8x4xf32> -> vector<8x4xf32>
    %52 = vector.extract_strided_slice %4 {offsets = [0, 12], sizes = [8, 4], strides = [1, 1]} : vector<8x32xf32> to vector<8x4xf32>
    %53 = vector.extract_strided_slice %5 {offsets = [0, 12], sizes = [8, 4], strides = [1, 1]} : vector<8x32xf32> to vector<8x4xf32>
    %54 = vector.extract_strided_slice %6 {offsets = [0, 12], sizes = [8, 4], strides = [1, 1]} : vector<8x32xf32> to vector<8x4xf32>
    %cst_16 = arith.constant dense<0.000000e+00> : vector<8x8xf32>
    %55 = tpu.matmul %52, %53, %cst_16 {dimension_numbers = #tpu.dot_dimension_numbers<[1], [1], [0], [0], [0, 0, 1, 0], [], []>} : vector<8x4xf32>, vector<8x4xf32>, vector<8x8xf32> -> vector<8x8xf32>
    %cst_17 = arith.constant dense<0xFF800000> : vector<8xf32>
    %56 = vector.multi_reduction <maximumf>, %55, %cst_17 [1] : vector<8x8xf32> to vector<8xf32>
    %57 = vector.shape_cast %56 : vector<8xf32> to vector<8x1xf32>
    %58 = vector.broadcast %57 : vector<8x1xf32> to vector<8x8xf32>
    %59 = arith.subf %55, %58 : vector<8x8xf32>
    %60 = math.exp %59 : vector<8x8xf32>
    %cst_18 = arith.constant dense<0.000000e+00> : vector<8xf32>
    %61 = vector.multi_reduction <add>, %60, %cst_18 [1] : vector<8x8xf32> to vector<8xf32>
    %62 = vector.shape_cast %61 : vector<8xf32> to vector<8x1xf32>
    %63 = tpu.reciprocal %62 {approx = true} : vector<8x1xf32> -> vector<8x1xf32>
    %64 = vector.broadcast %63 : vector<8x1xf32> to vector<8x8xf32>
    %65 = arith.mulf %60, %64 : vector<8x8xf32>
    %cst_19 = arith.constant dense<0.000000e+00> : vector<8x4xf32>
    %66 = tpu.matmul %65, %54, %cst_19 {dimension_numbers = #tpu.dot_dimension_numbers<[1], [0], [0], [1], [0, 0, 1, 1], [], []>} : vector<8x8xf32>, vector<8x4xf32>, vector<8x4xf32> -> vector<8x4xf32>
    %67 = vector.extract_strided_slice %4 {offsets = [0, 16], sizes = [8, 4], strides = [1, 1]} : vector<8x32xf32> to vector<8x4xf32>
    %68 = vector.extract_strided_slice %5 {offsets = [0, 16], sizes = [8, 4], strides = [1, 1]} : vector<8x32xf32> to vector<8x4xf32>
    %69 = vector.extract_strided_slice %6 {offsets = [0, 16], sizes = [8, 4], strides = [1, 1]} : vector<8x32xf32> to vector<8x4xf32>
    %cst_20 = arith.constant dense<0.000000e+00> : vector<8x8xf32>
    %70 = tpu.matmul %67, %68, %cst_20 {dimension_numbers = #tpu.dot_dimension_numbers<[1], [1], [0], [0], [0, 0, 1, 0], [], []>} : vector<8x4xf32>, vector<8x4xf32>, vector<8x8xf32> -> vector<8x8xf32>
    %cst_21 = arith.constant dense<0xFF800000> : vector<8xf32>
    %71 = vector.multi_reduction <maximumf>, %70, %cst_21 [1] : vector<8x8xf32> to vector<8xf32>
    %72 = vector.shape_cast %71 : vector<8xf32> to vector<8x1xf32>
    %73 = vector.broadcast %72 : vector<8x1xf32> to vector<8x8xf32>
    %74 = arith.subf %70, %73 : vector<8x8xf32>
    %75 = math.exp %74 : vector<8x8xf32>
    %cst_22 = arith.constant dense<0.000000e+00> : vector<8xf32>
    %76 = vector.multi_reduction <add>, %75, %cst_22 [1] : vector<8x8xf32> to vector<8xf32>
    %77 = vector.shape_cast %76 : vector<8xf32> to vector<8x1xf32>
    %78 = tpu.reciprocal %77 {approx = true} : vector<8x1xf32> -> vector<8x1xf32>
    %79 = vector.broadcast %78 : vector<8x1xf32> to vector<8x8xf32>
    %80 = arith.mulf %75, %79 : vector<8x8xf32>
    %cst_23 = arith.constant dense<0.000000e+00> : vector<8x4xf32>
    %81 = tpu.matmul %80, %69, %cst_23 {dimension_numbers = #tpu.dot_dimension_numbers<[1], [0], [0], [1], [0, 0, 1, 1], [], []>} : vector<8x8xf32>, vector<8x4xf32>, vector<8x4xf32> -> vector<8x4xf32>
    %82 = vector.extract_strided_slice %4 {offsets = [0, 20], sizes = [8, 4], strides = [1, 1]} : vector<8x32xf32> to vector<8x4xf32>
    %83 = vector.extract_strided_slice %5 {offsets = [0, 20], sizes = [8, 4], strides = [1, 1]} : vector<8x32xf32> to vector<8x4xf32>
    %84 = vector.extract_strided_slice %6 {offsets = [0, 20], sizes = [8, 4], strides = [1, 1]} : vector<8x32xf32> to vector<8x4xf32>
    %cst_24 = arith.constant dense<0.000000e+00> : vector<8x8xf32>
    %85 = tpu.matmul %82, %83, %cst_24 {dimension_numbers = #tpu.dot_dimension_numbers<[1], [1], [0], [0], [0, 0, 1, 0], [], []>} : vector<8x4xf32>, vector<8x4xf32>, vector<8x8xf32> -> vector<8x8xf32>
    %cst_25 = arith.constant dense<0xFF800000> : vector<8xf32>
    %86 = vector.multi_reduction <maximumf>, %85, %cst_25 [1] : vector<8x8xf32> to vector<8xf32>
    %87 = vector.shape_cast %86 : vector<8xf32> to vector<8x1xf32>
    %88 = vector.broadcast %87 : vector<8x1xf32> to vector<8x8xf32>
    %89 = arith.subf %85, %88 : vector<8x8xf32>
    %90 = math.exp %89 : vector<8x8xf32>
    %cst_26 = arith.constant dense<0.000000e+00> : vector<8xf32>
    %91 = vector.multi_reduction <add>, %90, %cst_26 [1] : vector<8x8xf32> to vector<8xf32>
    %92 = vector.shape_cast %91 : vector<8xf32> to vector<8x1xf32>
    %93 = tpu.reciprocal %92 {approx = true} : vector<8x1xf32> -> vector<8x1xf32>
    %94 = vector.broadcast %93 : vector<8x1xf32> to vector<8x8xf32>
    %95 = arith.mulf %90, %94 : vector<8x8xf32>
    %cst_27 = arith.constant dense<0.000000e+00> : vector<8x4xf32>
    %96 = tpu.matmul %95, %84, %cst_27 {dimension_numbers = #tpu.dot_dimension_numbers<[1], [0], [0], [1], [0, 0, 1, 1], [], []>} : vector<8x8xf32>, vector<8x4xf32>, vector<8x4xf32> -> vector<8x4xf32>
    %97 = vector.extract_strided_slice %4 {offsets = [0, 24], sizes = [8, 4], strides = [1, 1]} : vector<8x32xf32> to vector<8x4xf32>
    %98 = vector.extract_strided_slice %5 {offsets = [0, 24], sizes = [8, 4], strides = [1, 1]} : vector<8x32xf32> to vector<8x4xf32>
    %99 = vector.extract_strided_slice %6 {offsets = [0, 24], sizes = [8, 4], strides = [1, 1]} : vector<8x32xf32> to vector<8x4xf32>
    %cst_28 = arith.constant dense<0.000000e+00> : vector<8x8xf32>
    %100 = tpu.matmul %97, %98, %cst_28 {dimension_numbers = #tpu.dot_dimension_numbers<[1], [1], [0], [0], [0, 0, 1, 0], [], []>} : vector<8x4xf32>, vector<8x4xf32>, vector<8x8xf32> -> vector<8x8xf32>
    %cst_29 = arith.constant dense<0xFF800000> : vector<8xf32>
    %101 = vector.multi_reduction <maximumf>, %100, %cst_29 [1] : vector<8x8xf32> to vector<8xf32>
    %102 = vector.shape_cast %101 : vector<8xf32> to vector<8x1xf32>
    %103 = vector.broadcast %102 : vector<8x1xf32> to vector<8x8xf32>
    %104 = arith.subf %100, %103 : vector<8x8xf32>
    %105 = math.exp %104 : vector<8x8xf32>
    %cst_30 = arith.constant dense<0.000000e+00> : vector<8xf32>
    %106 = vector.multi_reduction <add>, %105, %cst_30 [1] : vector<8x8xf32> to vector<8xf32>
    %107 = vector.shape_cast %106 : vector<8xf32> to vector<8x1xf32>
    %108 = tpu.reciprocal %107 {approx = true} : vector<8x1xf32> -> vector<8x1xf32>
    %109 = vector.broadcast %108 : vector<8x1xf32> to vector<8x8xf32>
    %110 = arith.mulf %105, %109 : vector<8x8xf32>
    %cst_31 = arith.constant dense<0.000000e+00> : vector<8x4xf32>
    %111 = tpu.matmul %110, %99, %cst_31 {dimension_numbers = #tpu.dot_dimension_numbers<[1], [0], [0], [1], [0, 0, 1, 1], [], []>} : vector<8x8xf32>, vector<8x4xf32>, vector<8x4xf32> -> vector<8x4xf32>
    %112 = vector.extract_strided_slice %4 {offsets = [0, 28], sizes = [8, 4], strides = [1, 1]} : vector<8x32xf32> to vector<8x4xf32>
    %113 = vector.extract_strided_slice %5 {offsets = [0, 28], sizes = [8, 4], strides = [1, 1]} : vector<8x32xf32> to vector<8x4xf32>
    %114 = vector.extract_strided_slice %6 {offsets = [0, 28], sizes = [8, 4], strides = [1, 1]} : vector<8x32xf32> to vector<8x4xf32>
    %cst_32 = arith.constant dense<0.000000e+00> : vector<8x8xf32>
    %115 = tpu.matmul %112, %113, %cst_32 {dimension_numbers = #tpu.dot_dimension_numbers<[1], [1], [0], [0], [0, 0, 1, 0], [], []>} : vector<8x4xf32>, vector<8x4xf32>, vector<8x8xf32> -> vector<8x8xf32>
    %cst_33 = arith.constant dense<0xFF800000> : vector<8xf32>
    %116 = vector.multi_reduction <maximumf>, %115, %cst_33 [1] : vector<8x8xf32> to vector<8xf32>
    %117 = vector.shape_cast %116 : vector<8xf32> to vector<8x1xf32>
    %118 = vector.broadcast %117 : vector<8x1xf32> to vector<8x8xf32>
    %119 = arith.subf %115, %118 : vector<8x8xf32>
    %120 = math.exp %119 : vector<8x8xf32>
    %cst_34 = arith.constant dense<0.000000e+00> : vector<8xf32>
    %121 = vector.multi_reduction <add>, %120, %cst_34 [1] : vector<8x8xf32> to vector<8xf32>
    %122 = vector.shape_cast %121 : vector<8xf32> to vector<8x1xf32>
    %123 = tpu.reciprocal %122 {approx = true} : vector<8x1xf32> -> vector<8x1xf32>
    %124 = vector.broadcast %123 : vector<8x1xf32> to vector<8x8xf32>
    %125 = arith.mulf %120, %124 : vector<8x8xf32>
    %cst_35 = arith.constant dense<0.000000e+00> : vector<8x4xf32>
    %126 = tpu.matmul %125, %114, %cst_35 {dimension_numbers = #tpu.dot_dimension_numbers<[1], [0], [0], [1], [0, 0, 1, 1], [], []>} : vector<8x8xf32>, vector<8x4xf32>, vector<8x4xf32> -> vector<8x4xf32>
    %127 = tpu.concatenate %21, %36, %51, %66, %81, %96, %111, %126 in 1 : vector<8x4xf32>, vector<8x4xf32>, vector<8x4xf32>, vector<8x4xf32>, vector<8x4xf32>, vector<8x4xf32>, vector<8x4xf32>, vector<8x4xf32> -> vector<8x32xf32>
    %c0_36 = arith.constant 0 : index
    %c0_37 = arith.constant 0 : index
    %c0_38 = arith.constant 0 : index
    %128 = vector.load %arg3[%c0_36, %c0_37, %c0_38] : memref<1x8x32xf32, #tpu.memory_space<vmem>>, vector<1x8x32xf32>
    %129 = vector.shape_cast %128 : vector<1x8x32xf32> to vector<8x32xf32>
    %130 = vector.shape_cast %127 : vector<8x32xf32> to vector<1x8x32xf32>
    tpu.vector_store %arg3[%c0_36, %c0_37, %c0_38], %130 {strides = array<i32>} : memref<1x8x32xf32, #tpu.memory_space<vmem>>, vector<1x8x32xf32>,
    return
  }
  func.func @transform_0(%arg0: i32) -> (i32, i32, i32) {
    %c0_i32 = arith.constant 0 : i32
    %c0_i32_0 = arith.constant 0 : i32
    %c0_i32_1 = arith.constant 0 : i32
    return %arg0, %c0_i32, %c0_i32_0 : i32, i32, i32
  }
  func.func @transform_1(%arg0: i32) -> (i32, i32) {
    %c0_i32 = arith.constant 0 : i32
    %c0_i32_0 = arith.constant 0 : i32
    %c0_i32_1 = arith.constant 0 : i32
    return %c0_i32, %c0_i32_0 : i32, i32
  }
  func.func @transform_2(%arg0: i32) -> (i32, i32, i32) {
    %c0_i32 = arith.constant 0 : i32
    %c0_i32_0 = arith.constant 0 : i32
    %c0_i32_1 = arith.constant 0 : i32
    return %arg0, %c0_i32, %c0_i32_0 : i32, i32, i32
  }
}

</mosaic_0001>

<llo_original>
// kernel: tpu_custom_call.1
$region0: #{tpu_custom_call.1}
  #allocation0 [shape = 'u32[]', space=smem, size = 0x4, offset = 0x4, fixed_abs, tag = 'smem constant byte address 0x4 - core index']
  #allocation1 [shape = 'u32[144,128]{1,0:T(1,128)}', space=vmem, size = 0x12000, scoped, tag = 'internal scratch']
  %s0 = inlined_call_operand.hbm [shape: f32[2,8,32], index: 0, kind: input, shape index: {}]
  %s1 = inlined_call_operand.hbm [shape: f32[32,96], index: 1, kind: input, shape index: {}]
  %s2 = inlined_call_operand.hbm [shape: f32[2,8,32], index: 2, kind: output, shape index: {}]
  %s3 = sld [smem:[#allocation0]]
  $region49: #{tpu_custom_call.1} parent=0
    _
  %s5 = ssub.s32 1, %s3
  %s6 = scalar_select 0, %s5, %s3
  $region1: #{tpu_custom_call.1} parent=0
    #allocation2 [shape = 'u8[8192]{0}', space=vmem, size = 0x2000, scoped, tag = 'input window, operand 0']
    #allocation3 [shape = 's32[2]{0}', space=sflag, size = 0x8, scoped, tag = 'scoped memory for tpu_custom_call.1']
    #allocation4 [shape = 's32[2]{0}', space=sflag, size = 0x8, scoped, tag = 'scoped memory for tpu_custom_call.1']
    #allocation5 [shape = 'u8[16384]{0}', space=vmem, size = 0x4000, scoped, tag = 'input window, operand 1, single buffered']
    #allocation6 [shape = 's32[1]{0}', space=sflag, size = 0x4, scoped, tag = 'scoped memory for tpu_custom_call.1']
    #allocation7 [shape = 'u8[8192]{0}', space=vmem, size = 0x2000, scoped, tag = 'output window, operand 0']
    %7 = vsyncpa [#allocation3], 0
    %s8 = scalar_lea.sflag [#allocation3], 1
    %9 = vsyncpa %s8, 0
    %10 = vsyncpa [#allocation6], 0
    %11 = vsyncpa [#allocation4], 0
    %s12 = scalar_lea.sflag [#allocation4], 1
    %13 = vsyncpa %s12, 0
    loop: start=0, step=1, limit=4
    $region2: #{tpu_custom_call.1} parent=1 // loop_pre_header
      _
    $region3: #{tpu_custom_call.1} parent=1 // loop_header
      %s15 = sphi 0, %s19
      %p16 = scmp.ge.s32.totalorder %s15, 4
      %s25 = sphi 0, %s27
      %s28 = sphi 0, %s25
      %s29 = sphi 0, %s28
      %s45 = sphi 0, %s29
      %s49 = sphi 0, %s49
      %s51 = sphi 0, %s49
      %s52 = sphi 0, %s51
      %s66 = sphi 0, %s52
      %s72 = sphi 0, %s74
      %s75 = sphi 0, %s72
      %s76 = sphi 0, %s75
      %s92 = sphi 0, %s76
    $region4: #{tpu_custom_call.1} parent=1 // loop_header_branch
      %18 = sbr.rel (%p16) target = $region8
    $region5: #{tpu_custom_call.1} parent=1 // loop_body
      %s20 = ssub.s32 %s15, 1
      %s21 = ssub.s32 %s15, 2
      %s22 = sadd.s32 %s15, 1
      %s23 = ssub.s32 %s15, %s22
      %p24 = scmp.eq.s32.totalorder %s23, 0
      %s26 = sadd.s32 %s25, 1
      %s27 = scalar_select %p24, %s25, %s26
      %p30 = pneg %p24
      %p31 = scmp.eq.s32.totalorder %s15, 1
      %p32 = por %p30, %p31
      %p33 = scmp.ne.s32.totalorder %s25, %s28
      %p34 = scmp.eq.s32.totalorder %s15, 0
      %p35 = por %p33, %p34
      %p36 = scmp.ne.s32.totalorder %s25, %s28
      %p37 = scmp.eq.s32.totalorder %s20, 1
      %p38 = por %p36, %p37
      %p39 = scmp.ne.s32.totalorder %s28, %s29
      %p40 = scmp.eq.s32.totalorder %s20, 0
      %p41 = por %p39, %p40
      %p42 = scmp.ne.s32.totalorder %s28, %s29
      %p43 = scmp.eq.s32.totalorder %s21, 1
      %p44 = por %p42, %p43
      %p46 = scmp.ne.s32.totalorder %s29, %s45
      %p47 = scmp.eq.s32.totalorder %s21, 0
      %p48 = por %p46, %p47
      %s50 = sadd.s32 %s49, 1
      %p53 = scmp.eq.s32.totalorder %s15, 1
      %p54 = scmp.ne.s32.totalorder %s49, %s51
      %p55 = scmp.eq.s32.totalorder %s15, 0
      %p56 = por %p54, %p55
      %p57 = scmp.ne.s32.totalorder %s49, %s51
      %p58 = scmp.eq.s32.totalorder %s20, 1
      %p59 = por %p57, %p58
      %p60 = scmp.ne.s32.totalorder %s51, %s52
      %p61 = scmp.eq.s32.totalorder %s20, 0
      %p62 = por %p60, %p61
      %p63 = scmp.ne.s32.totalorder %s51, %s52
      %p64 = scmp.eq.s32.totalorder %s21, 1
      %p65 = por %p63, %p64
      %p67 = scmp.ne.s32.totalorder %s52, %s66
      %p68 = scmp.eq.s32.totalorder %s21, 0
      %p69 = por %p67, %p68
      %s70 = ssub.s32 %s15, %s22
      %p71 = scmp.eq.s32.totalorder %s70, 0
      %s73 = sadd.s32 %s72, 1
      %s74 = scalar_select %p71, %s72, %s73
      %p77 = pneg %p71
      %p78 = scmp.eq.s32.totalorder %s15, 1
      %p79 = por %p77, %p78
      %p80 = scmp.ne.s32.totalorder %s72, %s75
      %p81 = scmp.eq.s32.totalorder %s15, 0
      %p82 = por %p80, %p81
      %p83 = scmp.ne.s32.totalorder %s72, %s75
      %p84 = scmp.eq.s32.totalorder %s20, 1
      %p85 = por %p83, %p84
      %p86 = scmp.ne.s32.totalorder %s75, %s76
      %p87 = scmp.eq.s32.totalorder %s20, 0
      %p88 = por %p86, %p87
      %p89 = scmp.ne.s32.totalorder %s75, %s76
      %p90 = scmp.eq.s32.totalorder %s21, 1
      %p91 = por %p89, %p90
      %p93 = scmp.ne.s32.totalorder %s76, %s92
      %p94 = scmp.eq.s32.totalorder %s21, 0
      %p95 = por %p93, %p94
      %p96 = scmp.le.s32.totalorder 1, %s15
      %p97 = scmp.lt.s32.totalorder %s15, 3
      %p98 = pnand %p96, %p97
      %p99 = pneg %p98
      // Predicated region
      $region9: #{tpu_custom_call.1} parent=5 // pred_check
        _
      $region10: #{tpu_custom_call.1} parent=5 // pred_check_branch
        %101 = sbr.rel (%p98) target = $region12
      $region11: #{tpu_custom_call.1} parent=5 // pred_region
        %s102 = ssub.s32 %s15, 1
        // Predicated region
        $region13: #{tpu_custom_call.1} parent=11 // pred_check
          %p103 = pneg %p62
        $region14: #{tpu_custom_call.1} parent=11 // pred_check_branch
          %105 = sbr.rel (%p103) target = $region16
        $region15: #{tpu_custom_call.1} parent=11 // pred_region
          %s107 = ssub.s32 512, 512
          %108 = vsyncadd [#allocation6], %s107
          %s109 = sshll.u32 [#allocation5], 4
          %s110 = int_to_ptr.vmem [resolvable:$true] %s109
          %115 = dma.hbm_to_vmem [thread:$0]  %s1, 512, %s110, [#allocation6], 128, 128, 8
        $region16: #{tpu_custom_call.1} parent=11 // pred_fallthru
          _
      $region12: #{tpu_custom_call.1} parent=5 // pred_fallthru
        _
      %p116 = scmp.lt.s32.totalorder %s15, 2
      // Predicated region
      $region17: #{tpu_custom_call.1} parent=5 // pred_check
        %p117 = pneg %p116
      $region18: #{tpu_custom_call.1} parent=5 // pred_check_branch
        %119 = sbr.rel (%p117) target = $region20
      $region19: #{tpu_custom_call.1} parent=5 // pred_region
        // Predicated region
        $region21: #{tpu_custom_call.1} parent=19 // pred_check
          %p120 = pneg %p35
        $region22: #{tpu_custom_call.1} parent=19 // pred_check_branch
          %122 = sbr.rel (%p120) target = $region24
        $region23: #{tpu_custom_call.1} parent=19 // pred_region
          %s123 = sand.u32 %s25, 1
          %s124 = scalar_lea.sflag [#allocation3], %s123
          %s125 = sand.u32 %s25, 1
          %s126 = smul.addr %s125, 8
          %s127 = scalar_lea.vmem [#allocation2], %s126
          %s129 = ssub.s32 128, 128
          %130 = vsyncadd %s124, %s129
          %s131 = smul.addr %s15, 128
          %s132 = scalar_lea.hbm %s0, %s131
          %s134 = sshll.u32 %s127, 4
          %s135 = int_to_ptr.vmem [resolvable:$true] %s134
          %137 = dma.hbm_to_vmem [thread:$0]  %s132, 128, %s135, %s124
        $region24: #{tpu_custom_call.1} parent=19 // pred_fallthru
          _
      $region20: #{tpu_custom_call.1} parent=5 // pred_fallthru
        _
      %p138 = scmp.le.s32.totalorder 1, %s15
      %p139 = scmp.lt.s32.totalorder %s15, 3
      %p140 = pnand %p138, %p139
      %p141 = pneg %p140
      // Predicated region
      $region25: #{tpu_custom_call.1} parent=5 // pred_check
        _
      $region26: #{tpu_custom_call.1} parent=5 // pred_check_branch
        %143 = sbr.rel (%p140) target = $region28
      $region27: #{tpu_custom_call.1} parent=5 // pred_region
        %s144 = ssub.s32 %s15, 1
        %s145 = sand.u32 %s28, 1
        %s146 = scalar_lea.sflag [#allocation3], %s145
        %s147 = sand.u32 %s28, 1
        %s148 = smul.addr %s147, 8
        %s149 = scalar_lea.vmem [#allocation2], %s148
        // Predicated region
        $region29: #{tpu_custom_call.1} parent=27 // pred_check
          %p150 = pneg %p41
        $region30: #{tpu_custom_call.1} parent=27 // pred_check_branch
          %152 = sbr.rel (%p150) target = $region32
        $region31: #{tpu_custom_call.1} parent=27 // pred_region
          %153 = dma.done %s146, 128
        $region32: #{tpu_custom_call.1} parent=27 // pred_fallthru
          _
        // Predicated region
        $region33: #{tpu_custom_call.1} parent=27 // pred_check
          %p154 = pneg %p62
        $region34: #{tpu_custom_call.1} parent=27 // pred_check_branch
          %156 = sbr.rel (%p154) target = $region36
        $region35: #{tpu_custom_call.1} parent=27 // pred_region
          %157 = dma.done [#allocation6], 512
        $region36: #{tpu_custom_call.1} parent=27 // pred_fallthru
          _
        %s158 = sand.u32 %s28, 1
        %s159 = scalar_lea.sflag [#allocation3], %s158
        %s160 = sand.u32 %s28, 1
        %s161 = smul.addr %s160, 8
        %s162 = scalar_lea.vmem [#allocation2], %s161
        %p163 = pneg %p41
        %p164 = pneg %p38
        %p165 = pneg %p62
        %p166 = pneg %p59
        %p167 = pneg %p88
        %p168 = pneg %p85
        %s169 = sand.u32 %s75, 1
        %s170 = scalar_lea.sflag [#allocation4], %s169
        %s171 = sand.u32 %s75, 1
        %s172 = smul.addr %s171, 8
        %s173 = scalar_lea.vmem [#allocation7], %s172
        %v174 = vld [vmem:[%s149] sm:$0xff]
        %v175 = vld [vmem:[#allocation5] sm:$0xff]
        %v176 = vld [vmem:[#allocation5 + $0x8] sm:$0xff]
        %v177 = vld [vmem:[#allocation5 + $0x10] sm:$0xff]
        %v178 = vld [vmem:[#allocation5 + $0x18] sm:$0xff]
        %vm179 = vcmask 261120
        %v181 = vsel %vm179, %v174, 0
        %183 = vmatprep.subr.mxu0 0.0
        %184 = vmatpush1.msra.mxu0 %v175
        %185 = vmatprep.subr.mxu0 0.0
        %186 = vmatpush1.msra.mxu0 %v176
        %187 = vmatprep.subr.mxu0 0.0
        %188 = vmatpush1.msra.mxu0 %v177
        %189 = vmatprep.subr.mxu0 0.0
        %190 = vmatpush1.msra.mxu0 %v178
        %191 = vmatprep.subr.mxu0 0.0
        %192 = vmatpush1.msra.mxu0 0.0
        %193 = vmatprep.subr.mxu0 0.0
        %194 = vmatpush1.msra.mxu0 0.0
        %195 = vmatprep.subr.mxu0 0.0
        %196 = vmatpush1.msra.mxu0 0.0
        %197 = vmatprep.subr.mxu0 0.0
        %198 = vmatpush1.msra.mxu0 0.0
        %199 = vmatprep.subr.mxu0 0.0
        %200 = vmatpush1.msra.mxu0 0.0
        %201 = vmatprep.subr.mxu0 0.0
        %202 = vmatpush1.msra.mxu0 0.0
        %203 = vmatprep.subr.mxu0 0.0
        %204 = vmatpush1.msra.mxu0 0.0
        %205 = vmatprep.subr.mxu0 0.0
        %206 = vmatpush1.msra.mxu0 0.0
        %207 = vmatprep.subr.mxu0 0.0
        %208 = vmatpush1.msra.mxu0 0.0
        %209 = vmatprep.subr.mxu0 0.0
        %210 = vmatpush1.msra.mxu0 0.0
        %211 = vmatprep.subr.mxu0 0.0
        %212 = vmatpush1.msra.mxu0 0.0
        %213 = vmatprep.subr.mxu0 0.0
        %214 = vmatpush1.msra.mxu0 0.0
        %215 = vmatprep.subr.mxu0 0.0
        %216 = vmatpush1.msra.mxu0 0.0
        %217 = vmatprep.subr.mxu0 0.0
        %218 = vmatpush1.msra.mxu0 0.0
        %219 = vmatprep.subr.mxu0 0.0
        %220 = vmatpush1.msra.mxu0 0.0
        %221 = vmatprep.subr.mxu0 0.0
        %222 = vmatpush1.msra.mxu0 0.0
        %223 = vmatprep.subr.mxu0 0.0
        %224 = vmatpush1.msra.mxu0 0.0
        %225 = vmatprep.subr.mxu0 0.0
        %226 = vmatpush1.msra.mxu0 0.0
        %227 = vmatprep.subr.mxu0 0.0
        %228 = vmatpush1.msra.mxu0 0.0
        %229 = vmatprep.subr.mxu0 0.0
        %230 = vmatpush1.msra.mxu0 0.0
        %231 = vmatprep.subr.mxu0 0.0
        %232 = vmatpush1.msra.mxu0 0.0
        %233 = vmatprep.subr.mxu0 0.0
        %234 = vmatpush1.msra.mxu0 0.0
        %235 = vmatprep.subr.mxu0 0.0
        %236 = vmatpush1.msra.mxu0 0.0
        %237 = vmatprep.subr.mxu0 0.0
        %238 = vmatpush1.msra.mxu0 0.0
        %239 = vmatprep.subr.mxu0 0.0
        %240 = vmatpush1.msra.mxu0 0.0
        %241 = vmatprep.subr.mxu0 0.0
        %242 = vmatpush1.msra.mxu0 0.0
        %243 = vmatprep.subr.mxu0 0.0
        %244 = vmatpush1.msra.mxu0 0.0
        %245 = vmatprep.subr.mxu0 0.0
        %246 = vmatpush1.msra.mxu0 0.0
        %247 = vmatprep.mubr.f32.mxu0 0.0
        %248 = vmatmul.mubr.f32.gmra.mrb[0].mxu0 %v181
        %v249 = vpop.f32.mrb[0].mxu0
        %v250 = vadd.f32 0.0, %v249
        %v251 = vpop.f32.mrb[0].mxu0
        %252 = vdwg.mxu0
        %254 = vrot.lane.b32.xlu0 %v250, 96
        %v255 = vpop.permute.xlu0 %254
        %vm256 = vcmask 31744
        %v257 = vsel %vm256, %v250, 0
        %v259 = vsel %vm256, %v255, 0
        %261 = vmatprep.subr.mxu0 0.0
        %262 = vmatpush1.xpose.msra.mxu0 %v259
        %263 = vmatprep.subr.mxu0 0.0
        %264 = vmatpush1.xpose.msra.mxu0 0.0
        %265 = vmatprep.subr.mxu0 0.0
        %266 = vmatpush1.xpose.msra.mxu0 0.0
        %267 = vmatprep.subr.mxu0 0.0
        %268 = vmatpush1.xpose.msra.mxu0 0.0
        %269 = vmatprep.subr.mxu0 0.0
        %270 = vmatpush1.xpose.msra.mxu0 0.0
        %271 = vmatprep.subr.mxu0 0.0
        %272 = vmatpush1.xpose.msra.mxu0 0.0
        %273 = vmatprep.subr.mxu0 0.0
        %274 = vmatpush1.xpose.msra.mxu0 0.0
        %275 = vmatprep.subr.mxu0 0.0
        %276 = vmatpush1.xpose.msra.mxu0 0.0
        %277 = vmatprep.subr.mxu0 0.0
        %278 = vmatpush1.xpose.msra.mxu0 0.0
        %279 = vmatprep.subr.mxu0 0.0
        %280 = vmatpush1.xpose.msra.mxu0 0.0
        %281 = vmatprep.subr.mxu0 0.0
        %282 = vmatpush1.xpose.msra.mxu0 0.0
        %283 = vmatprep.subr.mxu0 0.0
        %284 = vmatpush1.xpose.msra.mxu0 0.0
        %285 = vmatprep.subr.mxu0 0.0
        %286 = vmatpush1.xpose.msra.mxu0 0.0
        %287 = vmatprep.subr.mxu0 0.0
        %288 = vmatpush1.xpose.msra.mxu0 0.0
        %289 = vmatprep.subr.mxu0 0.0
        %290 = vmatpush1.xpose.msra.mxu0 0.0
        %291 = vmatprep.subr.mxu0 0.0
        %292 = vmatpush1.xpose.msra.mxu0 0.0
        %293 = vmatprep.subr.mxu0 0.0
        %294 = vmatpush1.xpose.msra.mxu0 0.0
        %295 = vmatprep.subr.mxu0 0.0
        %296 = vmatpush1.xpose.msra.mxu0 0.0
        %297 = vmatprep.subr.mxu0 0.0
        %298 = vmatpush1.xpose.msra.mxu0 0.0
        %299 = vmatprep.subr.mxu0 0.0
        %300 = vmatpush1.xpose.msra.mxu0 0.0
        %301 = vmatprep.subr.mxu0 0.0
        %302 = vmatpush1.xpose.msra.mxu0 0.0
        %303 = vmatprep.subr.mxu0 0.0
        %304 = vmatpush1.xpose.msra.mxu0 0.0
        %305 = vmatprep.subr.mxu0 0.0
        %306 = vmatpush1.xpose.msra.mxu0 0.0
        %307 = vmatprep.subr.mxu0 0.0
        %308 = vmatpush1.xpose.msra.mxu0 0.0
        %309 = vmatprep.subr.mxu0 0.0
        %310 = vmatpush1.xpose.msra.mxu0 0.0
        %311 = vmatprep.subr.mxu0 0.0
        %312 = vmatpush1.xpose.msra.mxu0 0.0
        %313 = vmatprep.subr.mxu0 0.0
        %314 = vmatpush1.xpose.msra.mxu0 0.0
        %315 = vmatprep.subr.mxu0 0.0
        %316 = vmatpush1.xpose.msra.mxu0 0.0
        %317 = vmatprep.subr.mxu0 0.0
        %318 = vmatpush1.xpose.msra.mxu0 0.0
        %319 = vmatprep.subr.mxu0 0.0
        %320 = vmatpush1.xpose.msra.mxu0 0.0
        %321 = vmatprep.subr.mxu0 0.0
        %322 = vmatpush1.xpose.msra.mxu0 0.0
        %323 = vmatprep.subr.mxu0 0.0
        %324 = vmatpush1.xpose.msra.mxu0 0.0
        %325 = vmatprep.mubr.f32.mxu0 0.0
        %326 = vmatmul.mubr.f32.gmra.mrb[0].mxu0 %v257
        %v327 = vpop.f32.mrb[0].mxu0
        %v328 = vadd.f32 0.0, %v327
        %v329 = vpop.f32.mrb[0].mxu0
        %330 = vdwg.mxu0
        %vm331 = vcmask 64512
        %v332 = vsel %vm331, %v328, -inf
        %333 = vmax.xlane.f32.xlu0 %v332
        %v334 = vpop.xlane.xlu0 %333
        %v335 = vsub.f32 %v328, %v334
        %v336 = vmul.f32 %v335, 1.442695
        %v337 = vpow.pop %v336
        %v338 = vsel %vm331, %v337, 0.0
        %339 = vadd.xlane.f32.xlu0 %v338
        %v340 = vpop.xlane.xlu0 %339
        %v341 = vrcp.pop %v340
        %v342 = vmul.f32 %v337, %v341
        %343 = vrot.lane.b32.xlu0 %v250, 64
        %v344 = vpop.permute.xlu0 %343
        %v347 = vsel %vm331, %v342, 0
        %349 = vmatprep.subr.mxu0 0.0
        %350 = vmatpush1.msra.mxu0 %v344
        %351 = vmatprep.subr.mxu0 0.0
        %352 = vmatpush1.msra.mxu0 0.0
        %353 = vmatprep.subr.mxu0 0.0
        %354 = vmatpush1.msra.mxu0 0.0
        %355 = vmatprep.subr.mxu0 0.0
        %356 = vmatpush1.msra.mxu0 0.0
        %357 = vmatprep.subr.mxu0 0.0
        %358 = vmatpush1.msra.mxu0 0.0
        %359 = vmatprep.subr.mxu0 0.0
        %360 = vmatpush1.msra.mxu0 0.0
        %361 = vmatprep.subr.mxu0 0.0
        %362 = vmatpush1.msra.mxu0 0.0
        %363 = vmatprep.subr.mxu0 0.0
        %364 = vmatpush1.msra.mxu0 0.0
        %365 = vmatprep.subr.mxu0 0.0
        %366 = vmatpush1.msra.mxu0 0.0
        %367 = vmatprep.subr.mxu0 0.0
        %368 = vmatpush1.msra.mxu0 0.0
        %369 = vmatprep.subr.mxu0 0.0
        %370 = vmatpush1.msra.mxu0 0.0
        %371 = vmatprep.subr.mxu0 0.0
        %372 = vmatpush1.msra.mxu0 0.0
        %373 = vmatprep.subr.mxu0 0.0
        %374 = vmatpush1.msra.mxu0 0.0
        %375 = vmatprep.subr.mxu0 0.0
        %376 = vmatpush1.msra.mxu0 0.0
        %377 = vmatprep.subr.mxu0 0.0
        %378 = vmatpush1.msra.mxu0 0.0
        %379 = vmatprep.subr.mxu0 0.0
        %380 = vmatpush1.msra.mxu0 0.0
        %381 = vmatprep.subr.mxu0 0.0
        %382 = vmatpush1.msra.mxu0 0.0
        %383 = vmatprep.subr.mxu0 0.0
        %384 = vmatpush1.msra.mxu0 0.0
        %385 = vmatprep.subr.mxu0 0.0
        %386 = vmatpush1.msra.mxu0 0.0
        %387 = vmatprep.subr.mxu0 0.0
        %388 = vmatpush1.msra.mxu0 0.0
        %389 = vmatprep.subr.mxu0 0.0
        %390 = vmatpush1.msra.mxu0 0.0
        %391 = vmatprep.subr.mxu0 0.0
        %392 = vmatpush1.msra.mxu0 0.0
        %393 = vmatprep.subr.mxu0 0.0
        %394 = vmatpush1.msra.mxu0 0.0
        %395 = vmatprep.subr.mxu0 0.0
        %396 = vmatpush1.msra.mxu0 0.0
        %397 = vmatprep.subr.mxu0 0.0
        %398 = vmatpush1.msra.mxu0 0.0
        %399 = vmatprep.subr.mxu0 0.0
        %400 = vmatpush1.msra.mxu0 0.0
        %401 = vmatprep.subr.mxu0 0.0
        %402 = vmatpush1.msra.mxu0 0.0
        %403 = vmatprep.subr.mxu0 0.0
        %404 = vmatpush1.msra.mxu0 0.0
        %405 = vmatprep.subr.mxu0 0.0
        %406 = vmatpush1.msra.mxu0 0.0
        %407 = vmatprep.subr.mxu0 0.0
        %408 = vmatpush1.msra.mxu0 0.0
        %409 = vmatprep.subr.mxu0 0.0
        %410 = vmatpush1.msra.mxu0 0.0
        %411 = vmatprep.subr.mxu0 0.0
        %412 = vmatpush1.msra.mxu0 0.0
        %413 = vmatprep.mubr.f32.mxu0 0.0
        %414 = vmatmul.mubr.f32.gmra.mrb[0].mxu0 %v347
        %v415 = vpop.f32.mrb[0].mxu0
        %v416 = vadd.f32 0.0, %v415
        %v417 = vpop.f32.mrb[0].mxu0
        %418 = vdwg.mxu0
        %419 = vrot.lane.b32.xlu0 %v250, 124
        %v420 = vpop.permute.xlu0 %419
        %421 = vrot.lane.b32.xlu0 %v250, 92
        %v422 = vpop.permute.xlu0 %421
        %v423 = vsel %vm256, %v420, 0
        %v425 = vsel %vm256, %v422, 0
        %427 = vmatprep.subr.mxu0 0.0
        %428 = vmatpush1.xpose.msra.mxu0 %v425
        %429 = vmatprep.subr.mxu0 0.0
        %430 = vmatpush1.xpose.msra.mxu0 0.0
        %431 = vmatprep.subr.mxu0 0.0
        %432 = vmatpush1.xpose.msra.mxu0 0.0
        %433 = vmatprep.subr.mxu0 0.0
        %434 = vmatpush1.xpose.msra.mxu0 0.0
        %435 = vmatprep.subr.mxu0 0.0
        %436 = vmatpush1.xpose.msra.mxu0 0.0
        %437 = vmatprep.subr.mxu0 0.0
        %438 = vmatpush1.xpose.msra.mxu0 0.0
        %439 = vmatprep.subr.mxu0 0.0
        %440 = vmatpush1.xpose.msra.mxu0 0.0
        %441 = vmatprep.subr.mxu0 0.0
        %442 = vmatpush1.xpose.msra.mxu0 0.0
        %443 = vmatprep.subr.mxu0 0.0
        %444 = vmatpush1.xpose.msra.mxu0 0.0
        %445 = vmatprep.subr.mxu0 0.0
        %446 = vmatpush1.xpose.msra.mxu0 0.0
        %447 = vmatprep.subr.mxu0 0.0
        %448 = vmatpush1.xpose.msra.mxu0 0.0
        %449 = vmatprep.subr.mxu0 0.0
        %450 = vmatpush1.xpose.msra.mxu0 0.0
        %451 = vmatprep.subr.mxu0 0.0
        %452 = vmatpush1.xpose.msra.mxu0 0.0
        %453 = vmatprep.subr.mxu0 0.0
        %454 = vmatpush1.xpose.msra.mxu0 0.0
        %455 = vmatprep.subr.mxu0 0.0
        %456 = vmatpush1.xpose.msra.mxu0 0.0
        %457 = vmatprep.subr.mxu0 0.0
        %458 = vmatpush1.xpose.msra.mxu0 0.0
        %459 = vmatprep.subr.mxu0 0.0
        %460 = vmatpush1.xpose.msra.mxu0 0.0
        %461 = vmatprep.subr.mxu0 0.0
        %462 = vmatpush1.xpose.msra.mxu0 0.0
        %463 = vmatprep.subr.mxu0 0.0
        %464 = vmatpush1.xpose.msra.mxu0 0.0
        %465 = vmatprep.subr.mxu0 0.0
        %466 = vmatpush1.xpose.msra.mxu0 0.0
        %467 = vmatprep.subr.mxu0 0.0
        %468 = vmatpush1.xpose.msra.mxu0 0.0
        %469 = vmatprep.subr.mxu0 0.0
        %470 = vmatpush1.xpose.msra.mxu0 0.0
        %471 = vmatprep.subr.mxu0 0.0
        %472 = vmatpush1.xpose.msra.mxu0 0.0
        %473 = vmatprep.subr.mxu0 0.0
        %474 = vmatpush1.xpose.msra.mxu0 0.0
        %475 = vmatprep.subr.mxu0 0.0
        %476 = vmatpush1.xpose.msra.mxu0 0.0
        %477 = vmatprep.subr.mxu0 0.0
        %478 = vmatpush1.xpose.msra.mxu0 0.0
        %479 = vmatprep.subr.mxu0 0.0
        %480 = vmatpush1.xpose.msra.mxu0 0.0
        %481 = vmatprep.subr.mxu0 0.0
        %482 = vmatpush1.xpose.msra.mxu0 0.0
        %483 = vmatprep.subr.mxu0 0.0
        %484 = vmatpush1.xpose.msra.mxu0 0.0
        %485 = vmatprep.subr.mxu0 0.0
        %486 = vmatpush1.xpose.msra.mxu0 0.0
        %487 = vmatprep.subr.mxu0 0.0
        %488 = vmatpush1.xpose.msra.mxu0 0.0
        %489 = vmatprep.subr.mxu0 0.0
        %490 = vmatpush1.xpose.msra.mxu0 0.0
        %491 = vmatprep.mubr.f32.mxu0 0.0
        %492 = vmatmul.mubr.f32.gmra.mrb[0].mxu0 %v423
        %v493 = vpop.f32.mrb[0].mxu0
        %v494 = vadd.f32 0.0, %v493
        %v495 = vpop.f32.mrb[0].mxu0
        %496 = vdwg.mxu0
        %v497 = vsel %vm331, %v494, -inf
        %498 = vmax.xlane.f32.xlu0 %v497
        %v499 = vpop.xlane.xlu0 %498
        %v500 = vsub.f32 %v494, %v499
        %v501 = vmul.f32 %v500, 1.442695
        %v502 = vpow.pop %v501
        %v503 = vsel %vm331, %v502, 0.0
        %504 = vadd.xlane.f32.xlu0 %v503
        %v505 = vpop.xlane.xlu0 %504
        %v506 = vrcp.pop %v505
        %v507 = vmul.f32 %v502, %v506
        %508 = vrot.lane.b32.xlu0 %v250, 60
        %v509 = vpop.permute.xlu0 %508
        %v512 = vsel %vm331, %v507, 0
        %514 = vmatprep.subr.mxu0 0.0
        %515 = vmatpush1.msra.mxu0 %v509
        %516 = vmatprep.subr.mxu0 0.0
        %517 = vmatpush1.msra.mxu0 0.0
        %518 = vmatprep.subr.mxu0 0.0
        %519 = vmatpush1.msra.mxu0 0.0
        %520 = vmatprep.subr.mxu0 0.0
        %521 = vmatpush1.msra.mxu0 0.0
        %522 = vmatprep.subr.mxu0 0.0
        %523 = vmatpush1.msra.mxu0 0.0
        %524 = vmatprep.subr.mxu0 0.0
        %525 = vmatpush1.msra.mxu0 0.0
        %526 = vmatprep.subr.mxu0 0.0
        %527 = vmatpush1.msra.mxu0 0.0
        %528 = vmatprep.subr.mxu0 0.0
        %529 = vmatpush1.msra.mxu0 0.0
        %530 = vmatprep.subr.mxu0 0.0
        %531 = vmatpush1.msra.mxu0 0.0
        %532 = vmatprep.subr.mxu0 0.0
        %533 = vmatpush1.msra.mxu0 0.0
        %534 = vmatprep.subr.mxu0 0.0
        %535 = vmatpush1.msra.mxu0 0.0
        %536 = vmatprep.subr.mxu0 0.0
        %537 = vmatpush1.msra.mxu0 0.0
        %538 = vmatprep.subr.mxu0 0.0
        %539 = vmatpush1.msra.mxu0 0.0
        %540 = vmatprep.subr.mxu0 0.0
        %541 = vmatpush1.msra.mxu0 0.0
        %542 = vmatprep.subr.mxu0 0.0
        %543 = vmatpush1.msra.mxu0 0.0
        %544 = vmatprep.subr.mxu0 0.0
        %545 = vmatpush1.msra.mxu0 0.0
        %546 = vmatprep.subr.mxu0 0.0
        %547 = vmatpush1.msra.mxu0 0.0
        %548 = vmatprep.subr.mxu0 0.0
        %549 = vmatpush1.msra.mxu0 0.0
        %550 = vmatprep.subr.mxu0 0.0
        %551 = vmatpush1.msra.mxu0 0.0
        %552 = vmatprep.subr.mxu0 0.0
        %553 = vmatpush1.msra.mxu0 0.0
        %554 = vmatprep.subr.mxu0 0.0
        %555 = vmatpush1.msra.mxu0 0.0
        %556 = vmatprep.subr.mxu0 0.0
        %557 = vmatpush1.msra.mxu0 0.0
        %558 = vmatprep.subr.mxu0 0.0
        %559 = vmatpush1.msra.mxu0 0.0
        %560 = vmatprep.subr.mxu0 0.0
        %561 = vmatpush1.msra.mxu0 0.0
        %562 = vmatprep.subr.mxu0 0.0
        %563 = vmatpush1.msra.mxu0 0.0
        %564 = vmatprep.subr.mxu0 0.0
        %565 = vmatpush1.msra.mxu0 0.0
        %566 = vmatprep.subr.mxu0 0.0
        %567 = vmatpush1.msra.mxu0 0.0
        %568 = vmatprep.subr.mxu0 0.0
        %569 = vmatpush1.msra.mxu0 0.0
        %570 = vmatprep.subr.mxu0 0.0
        %571 = vmatpush1.msra.mxu0 0.0
        %572 = vmatprep.subr.mxu0 0.0
        %573 = vmatpush1.msra.mxu0 0.0
        %574 = vmatprep.subr.mxu0 0.0
        %575 = vmatpush1.msra.mxu0 0.0
        %576 = vmatprep.subr.mxu0 0.0
        %577 = vmatpush1.msra.mxu0 0.0
        %578 = vmatprep.mubr.f32.mxu0 0.0
        %579 = vmatmul.mubr.f32.gmra.mrb[0].mxu0 %v512
        %v580 = vpop.f32.mrb[0].mxu0
        %v581 = vadd.f32 0.0, %v580
        %v582 = vpop.f32.mrb[0].mxu0
        %583 = vdwg.mxu0
        %584 = vrot.lane.b32.xlu0 %v250, 120
        %v585 = vpop.permute.xlu0 %584
        %586 = vrot.lane.b32.xlu0 %v250, 88
        %v587 = vpop.permute.xlu0 %586
        %v588 = vsel %vm256, %v585, 0
        %v590 = vsel %vm256, %v587, 0
        %592 = vmatprep.subr.mxu0 0.0
        %593 = vmatpush1.xpose.msra.mxu0 %v590
        %594 = vmatprep.subr.mxu0 0.0
        %595 = vmatpush1.xpose.msra.mxu0 0.0
        %596 = vmatprep.subr.mxu0 0.0
        %597 = vmatpush1.xpose.msra.mxu0 0.0
        %598 = vmatprep.subr.mxu0 0.0
        %599 = vmatpush1.xpose.msra.mxu0 0.0
        %600 = vmatprep.subr.mxu0 0.0
        %601 = vmatpush1.xpose.msra.mxu0 0.0
        %602 = vmatprep.subr.mxu0 0.0
        %603 = vmatpush1.xpose.msra.mxu0 0.0
        %604 = vmatprep.subr.mxu0 0.0
        %605 = vmatpush1.xpose.msra.mxu0 0.0
        %606 = vmatprep.subr.mxu0 0.0
        %607 = vmatpush1.xpose.msra.mxu0 0.0
        %608 = vmatprep.subr.mxu0 0.0
        %609 = vmatpush1.xpose.msra.mxu0 0.0
        %610 = vmatprep.subr.mxu0 0.0
        %611 = vmatpush1.xpose.msra.mxu0 0.0
        %612 = vmatprep.subr.mxu0 0.0
        %613 = vmatpush1.xpose.msra.mxu0 0.0
        %614 = vmatprep.subr.mxu0 0.0
        %615 = vmatpush1.xpose.msra.mxu0 0.0
        %616 = vmatprep.subr.mxu0 0.0
        %617 = vmatpush1.xpose.msra.mxu0 0.0
        %618 = vmatprep.subr.mxu0 0.0
        %619 = vmatpush1.xpose.msra.mxu0 0.0
        %620 = vmatprep.subr.mxu0 0.0
        %621 = vmatpush1.xpose.msra.mxu0 0.0
        %622 = vmatprep.subr.mxu0 0.0
        %623 = vmatpush1.xpose.msra.mxu0 0.0
        %624 = vmatprep.subr.mxu0 0.0
        %625 = vmatpush1.xpose.msra.mxu0 0.0
        %626 = vmatprep.subr.mxu0 0.0
        %627 = vmatpush1.xpose.msra.mxu0 0.0
        %628 = vmatprep.subr.mxu0 0.0
        %629 = vmatpush1.xpose.msra.mxu0 0.0
        %630 = vmatprep.subr.mxu0 0.0
        %631 = vmatpush1.xpose.msra.mxu0 0.0
        %632 = vmatprep.subr.mxu0 0.0
        %633 = vmatpush1.xpose.msra.mxu0 0.0
        %634 = vmatprep.subr.mxu0 0.0
        %635 = vmatpush1.xpose.msra.mxu0 0.0
        %636 = vmatprep.subr.mxu0 0.0
        %637 = vmatpush1.xpose.msra.mxu0 0.0
        %638 = vmatprep.subr.mxu0 0.0
        %639 = vmatpush1.xpose.msra.mxu0 0.0
        %640 = vmatprep.subr.mxu0 0.0
        %641 = vmatpush1.xpose.msra.mxu0 0.0
        %642 = vmatprep.subr.mxu0 0.0
        %643 = vmatpush1.xpose.msra.mxu0 0.0
        %644 = vmatprep.subr.mxu0 0.0
        %645 = vmatpush1.xpose.msra.mxu0 0.0
        %646 = vmatprep.subr.mxu0 0.0
        %647 = vmatpush1.xpose.msra.mxu0 0.0
        %648 = vmatprep.subr.mxu0 0.0
        %649 = vmatpush1.xpose.msra.mxu0 0.0
        %650 = vmatprep.subr.mxu0 0.0
        %651 = vmatpush1.xpose.msra.mxu0 0.0
        %652 = vmatprep.subr.mxu0 0.0
        %653 = vmatpush1.xpose.msra.mxu0 0.0
        %654 = vmatprep.subr.mxu0 0.0
        %655 = vmatpush1.xpose.msra.mxu0 0.0
        %656 = vmatprep.mubr.f32.mxu0 0.0
        %657 = vmatmul.mubr.f32.gmra.mrb[0].mxu0 %v588
        %v658 = vpop.f32.mrb[0].mxu0
        %v659 = vadd.f32 0.0, %v658
        %v660 = vpop.f32.mrb[0].mxu0
        %661 = vdwg.mxu0
        %v662 = vsel %vm331, %v659, -inf
        %663 = vmax.xlane.f32.xlu0 %v662
        %v664 = vpop.xlane.xlu0 %663
        %v665 = vsub.f32 %v659, %v664
        %v666 = vmul.f32 %v665, 1.442695
        %v667 = vpow.pop %v666
        %v668 = vsel %vm331, %v667, 0.0
        %669 = vadd.xlane.f32.xlu0 %v668
        %v670 = vpop.xlane.xlu0 %669
        %v671 = vrcp.pop %v670
        %v672 = vmul.f32 %v667, %v671
        %673 = vrot.lane.b32.xlu0 %v250, 56
        %v674 = vpop.permute.xlu0 %673
        %v677 = vsel %vm331, %v672, 0
        %679 = vmatprep.subr.mxu0 0.0
        %680 = vmatpush1.msra.mxu0 %v674
        %681 = vmatprep.subr.mxu0 0.0
        %682 = vmatpush1.msra.mxu0 0.0
        %683 = vmatprep.subr.mxu0 0.0
        %684 = vmatpush1.msra.mxu0 0.0
        %685 = vmatprep.subr.mxu0 0.0
        %686 = vmatpush1.msra.mxu0 0.0
        %687 = vmatprep.subr.mxu0 0.0
        %688 = vmatpush1.msra.mxu0 0.0
        %689 = vmatprep.subr.mxu0 0.0
        %690 = vmatpush1.msra.mxu0 0.0
        %691 = vmatprep.subr.mxu0 0.0
        %692 = vmatpush1.msra.mxu0 0.0
        %693 = vmatprep.subr.mxu0 0.0
        %694 = vmatpush1.msra.mxu0 0.0
        %695 = vmatprep.subr.mxu0 0.0
        %696 = vmatpush1.msra.mxu0 0.0
        %697 = vmatprep.subr.mxu0 0.0
        %698 = vmatpush1.msra.mxu0 0.0
        %699 = vmatprep.subr.mxu0 0.0
        %700 = vmatpush1.msra.mxu0 0.0
        %701 = vmatprep.subr.mxu0 0.0
        %702 = vmatpush1.msra.mxu0 0.0
        %703 = vmatprep.subr.mxu0 0.0
        %704 = vmatpush1.msra.mxu0 0.0
        %705 = vmatprep.subr.mxu0 0.0
        %706 = vmatpush1.msra.mxu0 0.0
        %707 = vmatprep.subr.mxu0 0.0
        %708 = vmatpush1.msra.mxu0 0.0
        %709 = vmatprep.subr.mxu0 0.0
        %710 = vmatpush1.msra.mxu0 0.0
        %711 = vmatprep.subr.mxu0 0.0
        %712 = vmatpush1.msra.mxu0 0.0
        %713 = vmatprep.subr.mxu0 0.0
        %714 = vmatpush1.msra.mxu0 0.0
        %715 = vmatprep.subr.mxu0 0.0
        %716 = vmatpush1.msra.mxu0 0.0
        %717 = vmatprep.subr.mxu0 0.0
        %718 = vmatpush1.msra.mxu0 0.0
        %719 = vmatprep.subr.mxu0 0.0
        %720 = vmatpush1.msra.mxu0 0.0
        %721 = vmatprep.subr.mxu0 0.0
        %722 = vmatpush1.msra.mxu0 0.0
        %723 = vmatprep.subr.mxu0 0.0
        %724 = vmatpush1.msra.mxu0 0.0
        %725 = vmatprep.subr.mxu0 0.0
        %726 = vmatpush1.msra.mxu0 0.0
        %727 = vmatprep.subr.mxu0 0.0
        %728 = vmatpush1.msra.mxu0 0.0
        %729 = vmatprep.subr.mxu0 0.0
        %730 = vmatpush1.msra.mxu0 0.0
        %731 = vmatprep.subr.mxu0 0.0
        %732 = vmatpush1.msra.mxu0 0.0
        %733 = vmatprep.subr.mxu0 0.0
        %734 = vmatpush1.msra.mxu0 0.0
        %735 = vmatprep.subr.mxu0 0.0
        %736 = vmatpush1.msra.mxu0 0.0
        %737 = vmatprep.subr.mxu0 0.0
        %738 = vmatpush1.msra.mxu0 0.0
        %739 = vmatprep.subr.mxu0 0.0
        %740 = vmatpush1.msra.mxu0 0.0
        %741 = vmatprep.subr.mxu0 0.0
        %742 = vmatpush1.msra.mxu0 0.0
        %743 = vmatprep.mubr.f32.mxu0 0.0
        %744 = vmatmul.mubr.f32.gmra.mrb[0].mxu0 %v677
        %v745 = vpop.f32.mrb[0].mxu0
        %v746 = vadd.f32 0.0, %v745
        %v747 = vpop.f32.mrb[0].mxu0
        %748 = vdwg.mxu0
        %749 = vrot.lane.b32.xlu0 %v250, 116
        %v750 = vpop.permute.xlu0 %749
        %751 = vrot.lane.b32.xlu0 %v250, 84
        %v752 = vpop.permute.xlu0 %751
        %v753 = vsel %vm256, %v750, 0
        %v755 = vsel %vm256, %v752, 0
        %757 = vmatprep.subr.mxu0 0.0
        %758 = vmatpush1.xpose.msra.mxu0 %v755
        %759 = vmatprep.subr.mxu0 0.0
        %760 = vmatpush1.xpose.msra.mxu0 0.0
        %761 = vmatprep.subr.mxu0 0.0
        %762 = vmatpush1.xpose.msra.mxu0 0.0
        %763 = vmatprep.subr.mxu0 0.0
        %764 = vmatpush1.xpose.msra.mxu0 0.0
        %765 = vmatprep.subr.mxu0 0.0
        %766 = vmatpush1.xpose.msra.mxu0 0.0
        %767 = vmatprep.subr.mxu0 0.0
        %768 = vmatpush1.xpose.msra.mxu0 0.0
        %769 = vmatprep.subr.mxu0 0.0
        %770 = vmatpush1.xpose.msra.mxu0 0.0
        %771 = vmatprep.subr.mxu0 0.0
        %772 = vmatpush1.xpose.msra.mxu0 0.0
        %773 = vmatprep.subr.mxu0 0.0
        %774 = vmatpush1.xpose.msra.mxu0 0.0
        %775 = vmatprep.subr.mxu0 0.0
        %776 = vmatpush1.xpose.msra.mxu0 0.0
        %777 = vmatprep.subr.mxu0 0.0
        %778 = vmatpush1.xpose.msra.mxu0 0.0
        %779 = vmatprep.subr.mxu0 0.0
        %780 = vmatpush1.xpose.msra.mxu0 0.0
        %781 = vmatprep.subr.mxu0 0.0
        %782 = vmatpush1.xpose.msra.mxu0 0.0
        %783 = vmatprep.subr.mxu0 0.0
        %784 = vmatpush1.xpose.msra.mxu0 0.0
        %785 = vmatprep.subr.mxu0 0.0
        %786 = vmatpush1.xpose.msra.mxu0 0.0
        %787 = vmatprep.subr.mxu0 0.0
        %788 = vmatpush1.xpose.msra.mxu0 0.0
        %789 = vmatprep.subr.mxu0 0.0
        %790 = vmatpush1.xpose.msra.mxu0 0.0
        %791 = vmatprep.subr.mxu0 0.0
        %792 = vmatpush1.xpose.msra.mxu0 0.0
        %793 = vmatprep.subr.mxu0 0.0
        %794 = vmatpush1.xpose.msra.mxu0 0.0
        %795 = vmatprep.subr.mxu0 0.0
        %796 = vmatpush1.xpose.msra.mxu0 0.0
        %797 = vmatprep.subr.mxu0 0.0
        %798 = vmatpush1.xpose.msra.mxu0 0.0
        %799 = vmatprep.subr.mxu0 0.0
        %800 = vmatpush1.xpose.msra.mxu0 0.0
        %801 = vmatprep.subr.mxu0 0.0
        %802 = vmatpush1.xpose.msra.mxu0 0.0
        %803 = vmatprep.subr.mxu0 0.0
        %804 = vmatpush1.xpose.msra.mxu0 0.0
        %805 = vmatprep.subr.mxu0 0.0
        %806 = vmatpush1.xpose.msra.mxu0 0.0
        %807 = vmatprep.subr.mxu0 0.0
        %808 = vmatpush1.xpose.msra.mxu0 0.0
        %809 = vmatprep.subr.mxu0 0.0
        %810 = vmatpush1.xpose.msra.mxu0 0.0
        %811 = vmatprep.subr.mxu0 0.0
        %812 = vmatpush1.xpose.msra.mxu0 0.0
        %813 = vmatprep.subr.mxu0 0.0
        %814 = vmatpush1.xpose.msra.mxu0 0.0
        %815 = vmatprep.subr.mxu0 0.0
        %816 = vmatpush1.xpose.msra.mxu0 0.0
        %817 = vmatprep.subr.mxu0 0.0
        %818 = vmatpush1.xpose.msra.mxu0 0.0
        %819 = vmatprep.subr.mxu0 0.0
        %820 = vmatpush1.xpose.msra.mxu0 0.0
        %821 = vmatprep.mubr.f32.mxu0 0.0
        %822 = vmatmul.mubr.f32.gmra.mrb[0].mxu0 %v753
        %v823 = vpop.f32.mrb[0].mxu0
        %v824 = vadd.f32 0.0, %v823
        %v825 = vpop.f32.mrb[0].mxu0
        %826 = vdwg.mxu0
        %v827 = vsel %vm331, %v824, -inf
        %828 = vmax.xlane.f32.xlu0 %v827
        %v829 = vpop.xlane.xlu0 %828
        %v830 = vsub.f32 %v824, %v829
        %v831 = vmul.f32 %v830, 1.442695
        %v832 = vpow.pop %v831
        %v833 = vsel %vm331, %v832, 0.0
        %834 = vadd.xlane.f32.xlu0 %v833
        %v835 = vpop.xlane.xlu0 %834
        %v836 = vrcp.pop %v835
        %v837 = vmul.f32 %v832, %v836
        %838 = vrot.lane.b32.xlu0 %v250, 52
        %v839 = vpop.permute.xlu0 %838
        %v842 = vsel %vm331, %v837, 0
        %844 = vmatprep.subr.mxu0 0.0
        %845 = vmatpush1.msra.mxu0 %v839
        %846 = vmatprep.subr.mxu0 0.0
        %847 = vmatpush1.msra.mxu0 0.0
        %848 = vmatprep.subr.mxu0 0.0
        %849 = vmatpush1.msra.mxu0 0.0
        %850 = vmatprep.subr.mxu0 0.0
        %851 = vmatpush1.msra.mxu0 0.0
        %852 = vmatprep.subr.mxu0 0.0
        %853 = vmatpush1.msra.mxu0 0.0
        %854 = vmatprep.subr.mxu0 0.0
        %855 = vmatpush1.msra.mxu0 0.0
        %856 = vmatprep.subr.mxu0 0.0
        %857 = vmatpush1.msra.mxu0 0.0
        %858 = vmatprep.subr.mxu0 0.0
        %859 = vmatpush1.msra.mxu0 0.0
        %860 = vmatprep.subr.mxu0 0.0
        %861 = vmatpush1.msra.mxu0 0.0
        %862 = vmatprep.subr.mxu0 0.0
        %863 = vmatpush1.msra.mxu0 0.0
        %864 = vmatprep.subr.mxu0 0.0
        %865 = vmatpush1.msra.mxu0 0.0
        %866 = vmatprep.subr.mxu0 0.0
        %867 = vmatpush1.msra.mxu0 0.0
        %868 = vmatprep.subr.mxu0 0.0
        %869 = vmatpush1.msra.mxu0 0.0
        %870 = vmatprep.subr.mxu0 0.0
        %871 = vmatpush1.msra.mxu0 0.0
        %872 = vmatprep.subr.mxu0 0.0
        %873 = vmatpush1.msra.mxu0 0.0
        %874 = vmatprep.subr.mxu0 0.0
        %875 = vmatpush1.msra.mxu0 0.0
        %876 = vmatprep.subr.mxu0 0.0
        %877 = vmatpush1.msra.mxu0 0.0
        %878 = vmatprep.subr.mxu0 0.0
        %879 = vmatpush1.msra.mxu0 0.0
        %880 = vmatprep.subr.mxu0 0.0
        %881 = vmatpush1.msra.mxu0 0.0
        %882 = vmatprep.subr.mxu0 0.0
        %883 = vmatpush1.msra.mxu0 0.0
        %884 = vmatprep.subr.mxu0 0.0
        %885 = vmatpush1.msra.mxu0 0.0
        %886 = vmatprep.subr.mxu0 0.0
        %887 = vmatpush1.msra.mxu0 0.0
        %888 = vmatprep.subr.mxu0 0.0
        %889 = vmatpush1.msra.mxu0 0.0
        %890 = vmatprep.subr.mxu0 0.0
        %891 = vmatpush1.msra.mxu0 0.0
        %892 = vmatprep.subr.mxu0 0.0
        %893 = vmatpush1.msra.mxu0 0.0
        %894 = vmatprep.subr.mxu0 0.0
        %895 = vmatpush1.msra.mxu0 0.0
        %896 = vmatprep.subr.mxu0 0.0
        %897 = vmatpush1.msra.mxu0 0.0
        %898 = vmatprep.subr.mxu0 0.0
        %899 = vmatpush1.msra.mxu0 0.0
        %900 = vmatprep.subr.mxu0 0.0
        %901 = vmatpush1.msra.mxu0 0.0
        %902 = vmatprep.subr.mxu0 0.0
        %903 = vmatpush1.msra.mxu0 0.0
        %904 = vmatprep.subr.mxu0 0.0
        %905 = vmatpush1.msra.mxu0 0.0
        %906 = vmatprep.subr.mxu0 0.0
        %907 = vmatpush1.msra.mxu0 0.0
        %908 = vmatprep.mubr.f32.mxu0 0.0
        %909 = vmatmul.mubr.f32.gmra.mrb[0].mxu0 %v842
        %v910 = vpop.f32.mrb[0].mxu0
        %v911 = vadd.f32 0.0, %v910
        %v912 = vpop.f32.mrb[0].mxu0
        %913 = vdwg.mxu0
        %914 = vrot.lane.b32.xlu0 %v250, 112
        %v915 = vpop.permute.xlu0 %914
        %916 = vrot.lane.b32.xlu0 %v250, 80
        %v917 = vpop.permute.xlu0 %916
        %v918 = vsel %vm256, %v915, 0
        %v920 = vsel %vm256, %v917, 0
        %922 = vmatprep.subr.mxu0 0.0
        %923 = vmatpush1.xpose.msra.mxu0 %v920
        %924 = vmatprep.subr.mxu0 0.0
        %925 = vmatpush1.xpose.msra.mxu0 0.0
        %926 = vmatprep.subr.mxu0 0.0
        %927 = vmatpush1.xpose.msra.mxu0 0.0
        %928 = vmatprep.subr.mxu0 0.0
        %929 = vmatpush1.xpose.msra.mxu0 0.0
        %930 = vmatprep.subr.mxu0 0.0
        %931 = vmatpush1.xpose.msra.mxu0 0.0
        %932 = vmatprep.subr.mxu0 0.0
        %933 = vmatpush1.xpose.msra.mxu0 0.0
        %934 = vmatprep.subr.mxu0 0.0
        %935 = vmatpush1.xpose.msra.mxu0 0.0
        %936 = vmatprep.subr.mxu0 0.0
        %937 = vmatpush1.xpose.msra.mxu0 0.0
        %938 = vmatprep.subr.mxu0 0.0
        %939 = vmatpush1.xpose.msra.mxu0 0.0
        %940 = vmatprep.subr.mxu0 0.0
        %941 = vmatpush1.xpose.msra.mxu0 0.0
        %942 = vmatprep.subr.mxu0 0.0
        %943 = vmatpush1.xpose.msra.mxu0 0.0
        %944 = vmatprep.subr.mxu0 0.0
        %945 = vmatpush1.xpose.msra.mxu0 0.0
        %946 = vmatprep.subr.mxu0 0.0
        %947 = vmatpush1.xpose.msra.mxu0 0.0
        %948 = vmatprep.subr.mxu0 0.0
        %949 = vmatpush1.xpose.msra.mxu0 0.0
        %950 = vmatprep.subr.mxu0 0.0
        %951 = vmatpush1.xpose.msra.mxu0 0.0
        %952 = vmatprep.subr.mxu0 0.0
        %953 = vmatpush1.xpose.msra.mxu0 0.0
        %954 = vmatprep.subr.mxu0 0.0
        %955 = vmatpush1.xpose.msra.mxu0 0.0
        %956 = vmatprep.subr.mxu0 0.0
        %957 = vmatpush1.xpose.msra.mxu0 0.0
        %958 = vmatprep.subr.mxu0 0.0
        %959 = vmatpush1.xpose.msra.mxu0 0.0
        %960 = vmatprep.subr.mxu0 0.0
        %961 = vmatpush1.xpose.msra.mxu0 0.0
        %962 = vmatprep.subr.mxu0 0.0
        %963 = vmatpush1.xpose.msra.mxu0 0.0
        %964 = vmatprep.subr.mxu0 0.0
        %965 = vmatpush1.xpose.msra.mxu0 0.0
        %966 = vmatprep.subr.mxu0 0.0
        %967 = vmatpush1.xpose.msra.mxu0 0.0
        %968 = vmatprep.subr.mxu0 0.0
        %969 = vmatpush1.xpose.msra.mxu0 0.0
        %970 = vmatprep.subr.mxu0 0.0
        %971 = vmatpush1.xpose.msra.mxu0 0.0
        %972 = vmatprep.subr.mxu0 0.0
        %973 = vmatpush1.xpose.msra.mxu0 0.0
        %974 = vmatprep.subr.mxu0 0.0
        %975 = vmatpush1.xpose.msra.mxu0 0.0
        %976 = vmatprep.subr.mxu0 0.0
        %977 = vmatpush1.xpose.msra.mxu0 0.0
        %978 = vmatprep.subr.mxu0 0.0
        %979 = vmatpush1.xpose.msra.mxu0 0.0
        %980 = vmatprep.subr.mxu0 0.0
        %981 = vmatpush1.xpose.msra.mxu0 0.0
        %982 = vmatprep.subr.mxu0 0.0
        %983 = vmatpush1.xpose.msra.mxu0 0.0
        %984 = vmatprep.subr.mxu0 0.0
        %985 = vmatpush1.xpose.msra.mxu0 0.0
        %986 = vmatprep.mubr.f32.mxu0 0.0
        %987 = vmatmul.mubr.f32.gmra.mrb[0].mxu0 %v918
        %v988 = vpop.f32.mrb[0].mxu0
        %v989 = vadd.f32 0.0, %v988
        %v990 = vpop.f32.mrb[0].mxu0
        %991 = vdwg.mxu0
        %v992 = vsel %vm331, %v989, -inf
        %993 = vmax.xlane.f32.xlu0 %v992
        %v994 = vpop.xlane.xlu0 %993
        %v995 = vsub.f32 %v989, %v994
        %v996 = vmul.f32 %v995, 1.442695
        %v997 = vpow.pop %v996
        %v998 = vsel %vm331, %v997, 0.0
        %999 = vadd.xlane.f32.xlu0 %v998
        %v1000 = vpop.xlane.xlu0 %999
        %v1001 = vrcp.pop %v1000
        %v1002 = vmul.f32 %v997, %v1001
        %1003 = vrot.lane.b32.xlu0 %v250, 48
        %v1004 = vpop.permute.xlu0 %1003
        %v1007 = vsel %vm331, %v1002, 0
        %1009 = vmatprep.subr.mxu0 0.0
        %1010 = vmatpush1.msra.mxu0 %v1004
        %1011 = vmatprep.subr.mxu0 0.0
        %1012 = vmatpush1.msra.mxu0 0.0
        %1013 = vmatprep.subr.mxu0 0.0
        %1014 = vmatpush1.msra.mxu0 0.0
        %1015 = vmatprep.subr.mxu0 0.0
        %1016 = vmatpush1.msra.mxu0 0.0
        %1017 = vmatprep.subr.mxu0 0.0
        %1018 = vmatpush1.msra.mxu0 0.0
        %1019 = vmatprep.subr.mxu0 0.0
        %1020 = vmatpush1.msra.mxu0 0.0
        %1021 = vmatprep.subr.mxu0 0.0
        %1022 = vmatpush1.msra.mxu0 0.0
        %1023 = vmatprep.subr.mxu0 0.0
        %1024 = vmatpush1.msra.mxu0 0.0
        %1025 = vmatprep.subr.mxu0 0.0
        %1026 = vmatpush1.msra.mxu0 0.0
        %1027 = vmatprep.subr.mxu0 0.0
        %1028 = vmatpush1.msra.mxu0 0.0
        %1029 = vmatprep.subr.mxu0 0.0
        %1030 = vmatpush1.msra.mxu0 0.0
        %1031 = vmatprep.subr.mxu0 0.0
        %1032 = vmatpush1.msra.mxu0 0.0
        %1033 = vmatprep.subr.mxu0 0.0
        %1034 = vmatpush1.msra.mxu0 0.0
        %1035 = vmatprep.subr.mxu0 0.0
        %1036 = vmatpush1.msra.mxu0 0.0
        %1037 = vmatprep.subr.mxu0 0.0
        %1038 = vmatpush1.msra.mxu0 0.0
        %1039 = vmatprep.subr.mxu0 0.0
        %1040 = vmatpush1.msra.mxu0 0.0
        %1041 = vmatprep.subr.mxu0 0.0
        %1042 = vmatpush1.msra.mxu0 0.0
        %1043 = vmatprep.subr.mxu0 0.0
        %1044 = vmatpush1.msra.mxu0 0.0
        %1045 = vmatprep.subr.mxu0 0.0
        %1046 = vmatpush1.msra.mxu0 0.0
        %1047 = vmatprep.subr.mxu0 0.0
        %1048 = vmatpush1.msra.mxu0 0.0
        %1049 = vmatprep.subr.mxu0 0.0
        %1050 = vmatpush1.msra.mxu0 0.0
        %1051 = vmatprep.subr.mxu0 0.0
        %1052 = vmatpush1.msra.mxu0 0.0
        %1053 = vmatprep.subr.mxu0 0.0
        %1054 = vmatpush1.msra.mxu0 0.0
        %1055 = vmatprep.subr.mxu0 0.0
        %1056 = vmatpush1.msra.mxu0 0.0
        %1057 = vmatprep.subr.mxu0 0.0
        %1058 = vmatpush1.msra.mxu0 0.0
        %1059 = vmatprep.subr.mxu0 0.0
        %1060 = vmatpush1.msra.mxu0 0.0
        %1061 = vmatprep.subr.mxu0 0.0
        %1062 = vmatpush1.msra.mxu0 0.0
        %1063 = vmatprep.subr.mxu0 0.0
        %1064 = vmatpush1.msra.mxu0 0.0
        %1065 = vmatprep.subr.mxu0 0.0
        %1066 = vmatpush1.msra.mxu0 0.0
        %1067 = vmatprep.subr.mxu0 0.0
        %1068 = vmatpush1.msra.mxu0 0.0
        %1069 = vmatprep.subr.mxu0 0.0
        %1070 = vmatpush1.msra.mxu0 0.0
        %1071 = vmatprep.subr.mxu0 0.0
        %1072 = vmatpush1.msra.mxu0 0.0
        %1073 = vmatprep.mubr.f32.mxu0 0.0
        %1074 = vmatmul.mubr.f32.gmra.mrb[0].mxu0 %v1007
        %v1075 = vpop.f32.mrb[0].mxu0
        %v1076 = vadd.f32 0.0, %v1075
        %v1077 = vpop.f32.mrb[0].mxu0
        %1078 = vdwg.mxu0
        %1079 = vrot.lane.b32.xlu0 %v250, 108
        %v1080 = vpop.permute.xlu0 %1079
        %1081 = vrot.lane.b32.xlu0 %v250, 76
        %v1082 = vpop.permute.xlu0 %1081
        %v1083 = vsel %vm256, %v1080, 0
        %v1085 = vsel %vm256, %v1082, 0
        %1087 = vmatprep.subr.mxu0 0.0
        %1088 = vmatpush1.xpose.msra.mxu0 %v1085
        %1089 = vmatprep.subr.mxu0 0.0
        %1090 = vmatpush1.xpose.msra.mxu0 0.0
        %1091 = vmatprep.subr.mxu0 0.0
        %1092 = vmatpush1.xpose.msra.mxu0 0.0
        %1093 = vmatprep.subr.mxu0 0.0
        %1094 = vmatpush1.xpose.msra.mxu0 0.0
        %1095 = vmatprep.subr.mxu0 0.0
        %1096 = vmatpush1.xpose.msra.mxu0 0.0
        %1097 = vmatprep.subr.mxu0 0.0
        %1098 = vmatpush1.xpose.msra.mxu0 0.0
        %1099 = vmatprep.subr.mxu0 0.0
        %1100 = vmatpush1.xpose.msra.mxu0 0.0
        %1101 = vmatprep.subr.mxu0 0.0
        %1102 = vmatpush1.xpose.msra.mxu0 0.0
        %1103 = vmatprep.subr.mxu0 0.0
        %1104 = vmatpush1.xpose.msra.mxu0 0.0
        %1105 = vmatprep.subr.mxu0 0.0
        %1106 = vmatpush1.xpose.msra.mxu0 0.0
        %1107 = vmatprep.subr.mxu0 0.0
        %1108 = vmatpush1.xpose.msra.mxu0 0.0
        %1109 = vmatprep.subr.mxu0 0.0
        %1110 = vmatpush1.xpose.msra.mxu0 0.0
        %1111 = vmatprep.subr.mxu0 0.0
        %1112 = vmatpush1.xpose.msra.mxu0 0.0
        %1113 = vmatprep.subr.mxu0 0.0
        %1114 = vmatpush1.xpose.msra.mxu0 0.0
        %1115 = vmatprep.subr.mxu0 0.0
        %1116 = vmatpush1.xpose.msra.mxu0 0.0
        %1117 = vmatprep.subr.mxu0 0.0
        %1118 = vmatpush1.xpose.msra.mxu0 0.0
        %1119 = vmatprep.subr.mxu0 0.0
        %1120 = vmatpush1.xpose.msra.mxu0 0.0
        %1121 = vmatprep.subr.mxu0 0.0
        %1122 = vmatpush1.xpose.msra.mxu0 0.0
        %1123 = vmatprep.subr.mxu0 0.0
        %1124 = vmatpush1.xpose.msra.mxu0 0.0
        %1125 = vmatprep.subr.mxu0 0.0
        %1126 = vmatpush1.xpose.msra.mxu0 0.0
        %1127 = vmatprep.subr.mxu0 0.0
        %1128 = vmatpush1.xpose.msra.mxu0 0.0
        %1129 = vmatprep.subr.mxu0 0.0
        %1130 = vmatpush1.xpose.msra.mxu0 0.0
        %1131 = vmatprep.subr.mxu0 0.0
        %1132 = vmatpush1.xpose.msra.mxu0 0.0
        %1133 = vmatprep.subr.mxu0 0.0
        %1134 = vmatpush1.xpose.msra.mxu0 0.0
        %1135 = vmatprep.subr.mxu0 0.0
        %1136 = vmatpush1.xpose.msra.mxu0 0.0
        %1137 = vmatprep.subr.mxu0 0.0
        %1138 = vmatpush1.xpose.msra.mxu0 0.0
        %1139 = vmatprep.subr.mxu0 0.0
        %1140 = vmatpush1.xpose.msra.mxu0 0.0
        %1141 = vmatprep.subr.mxu0 0.0
        %1142 = vmatpush1.xpose.msra.mxu0 0.0
        %1143 = vmatprep.subr.mxu0 0.0
        %1144 = vmatpush1.xpose.msra.mxu0 0.0
        %1145 = vmatprep.subr.mxu0 0.0
        %1146 = vmatpush1.xpose.msra.mxu0 0.0
        %1147 = vmatprep.subr.mxu0 0.0
        %1148 = vmatpush1.xpose.msra.mxu0 0.0
        %1149 = vmatprep.subr.mxu0 0.0
        %1150 = vmatpush1.xpose.msra.mxu0 0.0
        %1151 = vmatprep.mubr.f32.mxu0 0.0
        %1152 = vmatmul.mubr.f32.gmra.mrb[0].mxu0 %v1083
        %v1153 = vpop.f32.mrb[0].mxu0
        %v1154 = vadd.f32 0.0, %v1153
        %v1155 = vpop.f32.mrb[0].mxu0
        %1156 = vdwg.mxu0
        %v1157 = vsel %vm331, %v1154, -inf
        %1158 = vmax.xlane.f32.xlu0 %v1157
        %v1159 = vpop.xlane.xlu0 %1158
        %v1160 = vsub.f32 %v1154, %v1159
        %v1161 = vmul.f32 %v1160, 1.442695
        %v1162 = vpow.pop %v1161
        %v1163 = vsel %vm331, %v1162, 0.0
        %1164 = vadd.xlane.f32.xlu0 %v1163
        %v1165 = vpop.xlane.xlu0 %1164
        %v1166 = vrcp.pop %v1165
        %v1167 = vmul.f32 %v1162, %v1166
        %1168 = vrot.lane.b32.xlu0 %v250, 44
        %v1169 = vpop.permute.xlu0 %1168
        %v1172 = vsel %vm331, %v1167, 0
        %1174 = vmatprep.subr.mxu0 0.0
        %1175 = vmatpush1.msra.mxu0 %v1169
        %1176 = vmatprep.subr.mxu0 0.0
        %1177 = vmatpush1.msra.mxu0 0.0
        %1178 = vmatprep.subr.mxu0 0.0
        %1179 = vmatpush1.msra.mxu0 0.0
        %1180 = vmatprep.subr.mxu0 0.0
        %1181 = vmatpush1.msra.mxu0 0.0
        %1182 = vmatprep.subr.mxu0 0.0
        %1183 = vmatpush1.msra.mxu0 0.0
        %1184 = vmatprep.subr.mxu0 0.0
        %1185 = vmatpush1.msra.mxu0 0.0
        %1186 = vmatprep.subr.mxu0 0.0
        %1187 = vmatpush1.msra.mxu0 0.0
        %1188 = vmatprep.subr.mxu0 0.0
        %1189 = vmatpush1.msra.mxu0 0.0
        %1190 = vmatprep.subr.mxu0 0.0
        %1191 = vmatpush1.msra.mxu0 0.0
        %1192 = vmatprep.subr.mxu0 0.0
        %1193 = vmatpush1.msra.mxu0 0.0
        %1194 = vmatprep.subr.mxu0 0.0
        %1195 = vmatpush1.msra.mxu0 0.0
        %1196 = vmatprep.subr.mxu0 0.0
        %1197 = vmatpush1.msra.mxu0 0.0
        %1198 = vmatprep.subr.mxu0 0.0
        %1199 = vmatpush1.msra.mxu0 0.0
        %1200 = vmatprep.subr.mxu0 0.0
        %1201 = vmatpush1.msra.mxu0 0.0
        %1202 = vmatprep.subr.mxu0 0.0
        %1203 = vmatpush1.msra.mxu0 0.0
        %1204 = vmatprep.subr.mxu0 0.0
        %1205 = vmatpush1.msra.mxu0 0.0
        %1206 = vmatprep.subr.mxu0 0.0
        %1207 = vmatpush1.msra.mxu0 0.0
        %1208 = vmatprep.subr.mxu0 0.0
        %1209 = vmatpush1.msra.mxu0 0.0
        %1210 = vmatprep.subr.mxu0 0.0
        %1211 = vmatpush1.msra.mxu0 0.0
        %1212 = vmatprep.subr.mxu0 0.0
        %1213 = vmatpush1.msra.mxu0 0.0
        %1214 = vmatprep.subr.mxu0 0.0
        %1215 = vmatpush1.msra.mxu0 0.0
        %1216 = vmatprep.subr.mxu0 0.0
        %1217 = vmatpush1.msra.mxu0 0.0
        %1218 = vmatprep.subr.mxu0 0.0
        %1219 = vmatpush1.msra.mxu0 0.0
        %1220 = vmatprep.subr.mxu0 0.0
        %1221 = vmatpush1.msra.mxu0 0.0
        %1222 = vmatprep.subr.mxu0 0.0
        %1223 = vmatpush1.msra.mxu0 0.0
        %1224 = vmatprep.subr.mxu0 0.0
        %1225 = vmatpush1.msra.mxu0 0.0
        %1226 = vmatprep.subr.mxu0 0.0
        %1227 = vmatpush1.msra.mxu0 0.0
        %1228 = vmatprep.subr.mxu0 0.0
        %1229 = vmatpush1.msra.mxu0 0.0
        %1230 = vmatprep.subr.mxu0 0.0
        %1231 = vmatpush1.msra.mxu0 0.0
        %1232 = vmatprep.subr.mxu0 0.0
        %1233 = vmatpush1.msra.mxu0 0.0
        %1234 = vmatprep.subr.mxu0 0.0
        %1235 = vmatpush1.msra.mxu0 0.0
        %1236 = vmatprep.subr.mxu0 0.0
        %1237 = vmatpush1.msra.mxu0 0.0
        %1238 = vmatprep.mubr.f32.mxu0 0.0
        %1239 = vmatmul.mubr.f32.gmra.mrb[0].mxu0 %v1172
        %v1240 = vpop.f32.mrb[0].mxu0
        %v1241 = vadd.f32 0.0, %v1240
        %v1242 = vpop.f32.mrb[0].mxu0
        %1243 = vdwg.mxu0
        %1244 = vrot.lane.b32.xlu0 %v250, 104
        %v1245 = vpop.permute.xlu0 %1244
        %1246 = vrot.lane.b32.xlu0 %v250, 72
        %v1247 = vpop.permute.xlu0 %1246
        %v1248 = vsel %vm256, %v1245, 0
        %v1250 = vsel %vm256, %v1247, 0
        %1252 = vmatprep.subr.mxu0 0.0
        %1253 = vmatpush1.xpose.msra.mxu0 %v1250
        %1254 = vmatprep.subr.mxu0 0.0
        %1255 = vmatpush1.xpose.msra.mxu0 0.0
        %1256 = vmatprep.subr.mxu0 0.0
        %1257 = vmatpush1.xpose.msra.mxu0 0.0
        %1258 = vmatprep.subr.mxu0 0.0
        %1259 = vmatpush1.xpose.msra.mxu0 0.0
        %1260 = vmatprep.subr.mxu0 0.0
        %1261 = vmatpush1.xpose.msra.mxu0 0.0
        %1262 = vmatprep.subr.mxu0 0.0
        %1263 = vmatpush1.xpose.msra.mxu0 0.0
        %1264 = vmatprep.subr.mxu0 0.0
        %1265 = vmatpush1.xpose.msra.mxu0 0.0
        %1266 = vmatprep.subr.mxu0 0.0
        %1267 = vmatpush1.xpose.msra.mxu0 0.0
        %1268 = vmatprep.subr.mxu0 0.0
        %1269 = vmatpush1.xpose.msra.mxu0 0.0
        %1270 = vmatprep.subr.mxu0 0.0
        %1271 = vmatpush1.xpose.msra.mxu0 0.0
        %1272 = vmatprep.subr.mxu0 0.0
        %1273 = vmatpush1.xpose.msra.mxu0 0.0
        %1274 = vmatprep.subr.mxu0 0.0
        %1275 = vmatpush1.xpose.msra.mxu0 0.0
        %1276 = vmatprep.subr.mxu0 0.0
        %1277 = vmatpush1.xpose.msra.mxu0 0.0
        %1278 = vmatprep.subr.mxu0 0.0
        %1279 = vmatpush1.xpose.msra.mxu0 0.0
        %1280 = vmatprep.subr.mxu0 0.0
        %1281 = vmatpush1.xpose.msra.mxu0 0.0
        %1282 = vmatprep.subr.mxu0 0.0
        %1283 = vmatpush1.xpose.msra.mxu0 0.0
        %1284 = vmatprep.subr.mxu0 0.0
        %1285 = vmatpush1.xpose.msra.mxu0 0.0
        %1286 = vmatprep.subr.mxu0 0.0
        %1287 = vmatpush1.xpose.msra.mxu0 0.0
        %1288 = vmatprep.subr.mxu0 0.0
        %1289 = vmatpush1.xpose.msra.mxu0 0.0
        %1290 = vmatprep.subr.mxu0 0.0
        %1291 = vmatpush1.xpose.msra.mxu0 0.0
        %1292 = vmatprep.subr.mxu0 0.0
        %1293 = vmatpush1.xpose.msra.mxu0 0.0
        %1294 = vmatprep.subr.mxu0 0.0
        %1295 = vmatpush1.xpose.msra.mxu0 0.0
        %1296 = vmatprep.subr.mxu0 0.0
        %1297 = vmatpush1.xpose.msra.mxu0 0.0
        %1298 = vmatprep.subr.mxu0 0.0
        %1299 = vmatpush1.xpose.msra.mxu0 0.0
        %1300 = vmatprep.subr.mxu0 0.0
        %1301 = vmatpush1.xpose.msra.mxu0 0.0
        %1302 = vmatprep.subr.mxu0 0.0
        %1303 = vmatpush1.xpose.msra.mxu0 0.0
        %1304 = vmatprep.subr.mxu0 0.0
        %1305 = vmatpush1.xpose.msra.mxu0 0.0
        %1306 = vmatprep.subr.mxu0 0.0
        %1307 = vmatpush1.xpose.msra.mxu0 0.0
        %1308 = vmatprep.subr.mxu0 0.0
        %1309 = vmatpush1.xpose.msra.mxu0 0.0
        %1310 = vmatprep.subr.mxu0 0.0
        %1311 = vmatpush1.xpose.msra.mxu0 0.0
        %1312 = vmatprep.subr.mxu0 0.0
        %1313 = vmatpush1.xpose.msra.mxu0 0.0
        %1314 = vmatprep.subr.mxu0 0.0
        %1315 = vmatpush1.xpose.msra.mxu0 0.0
        %1316 = vmatprep.mubr.f32.mxu0 0.0
        %1317 = vmatmul.mubr.f32.gmra.mrb[0].mxu0 %v1248
        %v1318 = vpop.f32.mrb[0].mxu0
        %v1319 = vadd.f32 0.0, %v1318
        %v1320 = vpop.f32.mrb[0].mxu0
        %1321 = vdwg.mxu0
        %v1322 = vsel %vm331, %v1319, -inf
        %1323 = vmax.xlane.f32.xlu0 %v1322
        %v1324 = vpop.xlane.xlu0 %1323
        %v1325 = vsub.f32 %v1319, %v1324
        %v1326 = vmul.f32 %v1325, 1.442695
        %v1327 = vpow.pop %v1326
        %v1328 = vsel %vm331, %v1327, 0.0
        %1329 = vadd.xlane.f32.xlu0 %v1328
        %v1330 = vpop.xlane.xlu0 %1329
        %v1331 = vrcp.pop %v1330
        %v1332 = vmul.f32 %v1327, %v1331
        %1333 = vrot.lane.b32.xlu0 %v250, 40
        %v1334 = vpop.permute.xlu0 %1333
        %v1337 = vsel %vm331, %v1332, 0
        %1339 = vmatprep.subr.mxu0 0.0
        %1340 = vmatpush1.msra.mxu0 %v1334
        %1341 = vmatprep.subr.mxu0 0.0
        %1342 = vmatpush1.msra.mxu0 0.0
        %1343 = vmatprep.subr.mxu0 0.0
        %1344 = vmatpush1.msra.mxu0 0.0
        %1345 = vmatprep.subr.mxu0 0.0
        %1346 = vmatpush1.msra.mxu0 0.0
        %1347 = vmatprep.subr.mxu0 0.0
        %1348 = vmatpush1.msra.mxu0 0.0
        %1349 = vmatprep.subr.mxu0 0.0
        %1350 = vmatpush1.msra.mxu0 0.0
        %1351 = vmatprep.subr.mxu0 0.0
        %1352 = vmatpush1.msra.mxu0 0.0
        %1353 = vmatprep.subr.mxu0 0.0
        %1354 = vmatpush1.msra.mxu0 0.0
        %1355 = vmatprep.subr.mxu0 0.0
        %1356 = vmatpush1.msra.mxu0 0.0
        %1357 = vmatprep.subr.mxu0 0.0
        %1358 = vmatpush1.msra.mxu0 0.0
        %1359 = vmatprep.subr.mxu0 0.0
        %1360 = vmatpush1.msra.mxu0 0.0
        %1361 = vmatprep.subr.mxu0 0.0
        %1362 = vmatpush1.msra.mxu0 0.0
        %1363 = vmatprep.subr.mxu0 0.0
        %1364 = vmatpush1.msra.mxu0 0.0
        %1365 = vmatprep.subr.mxu0 0.0
        %1366 = vmatpush1.msra.mxu0 0.0
        %1367 = vmatprep.subr.mxu0 0.0
        %1368 = vmatpush1.msra.mxu0 0.0
        %1369 = vmatprep.subr.mxu0 0.0
        %1370 = vmatpush1.msra.mxu0 0.0
        %1371 = vmatprep.subr.mxu0 0.0
        %1372 = vmatpush1.msra.mxu0 0.0
        %1373 = vmatprep.subr.mxu0 0.0
        %1374 = vmatpush1.msra.mxu0 0.0
        %1375 = vmatprep.subr.mxu0 0.0
        %1376 = vmatpush1.msra.mxu0 0.0
        %1377 = vmatprep.subr.mxu0 0.0
        %1378 = vmatpush1.msra.mxu0 0.0
        %1379 = vmatprep.subr.mxu0 0.0
        %1380 = vmatpush1.msra.mxu0 0.0
        %1381 = vmatprep.subr.mxu0 0.0
        %1382 = vmatpush1.msra.mxu0 0.0
        %1383 = vmatprep.subr.mxu0 0.0
        %1384 = vmatpush1.msra.mxu0 0.0
        %1385 = vmatprep.subr.mxu0 0.0
        %1386 = vmatpush1.msra.mxu0 0.0
        %1387 = vmatprep.subr.mxu0 0.0
        %1388 = vmatpush1.msra.mxu0 0.0
        %1389 = vmatprep.subr.mxu0 0.0
        %1390 = vmatpush1.msra.mxu0 0.0
        %1391 = vmatprep.subr.mxu0 0.0
        %1392 = vmatpush1.msra.mxu0 0.0
        %1393 = vmatprep.subr.mxu0 0.0
        %1394 = vmatpush1.msra.mxu0 0.0
        %1395 = vmatprep.subr.mxu0 0.0
        %1396 = vmatpush1.msra.mxu0 0.0
        %1397 = vmatprep.subr.mxu0 0.0
        %1398 = vmatpush1.msra.mxu0 0.0
        %1399 = vmatprep.subr.mxu0 0.0
        %1400 = vmatpush1.msra.mxu0 0.0
        %1401 = vmatprep.subr.mxu0 0.0
        %1402 = vmatpush1.msra.mxu0 0.0
        %1403 = vmatprep.mubr.f32.mxu0 0.0
        %1404 = vmatmul.mubr.f32.gmra.mrb[0].mxu0 %v1337
        %v1405 = vpop.f32.mrb[0].mxu0
        %v1406 = vadd.f32 0.0, %v1405
        %v1407 = vpop.f32.mrb[0].mxu0
        %1408 = vdwg.mxu0
        %1409 = vrot.lane.b32.xlu0 %v250, 100
        %v1410 = vpop.permute.xlu0 %1409
        %1411 = vrot.lane.b32.xlu0 %v250, 68
        %v1412 = vpop.permute.xlu0 %1411
        %v1413 = vsel %vm256, %v1410, 0
        %v1415 = vsel %vm256, %v1412, 0
        %1417 = vmatprep.subr.mxu0 0.0
        %1418 = vmatpush1.xpose.msra.mxu0 %v1415
        %1419 = vmatprep.subr.mxu0 0.0
        %1420 = vmatpush1.xpose.msra.mxu0 0.0
        %1421 = vmatprep.subr.mxu0 0.0
        %1422 = vmatpush1.xpose.msra.mxu0 0.0
        %1423 = vmatprep.subr.mxu0 0.0
        %1424 = vmatpush1.xpose.msra.mxu0 0.0
        %1425 = vmatprep.subr.mxu0 0.0
        %1426 = vmatpush1.xpose.msra.mxu0 0.0
        %1427 = vmatprep.subr.mxu0 0.0
        %1428 = vmatpush1.xpose.msra.mxu0 0.0
        %1429 = vmatprep.subr.mxu0 0.0
        %1430 = vmatpush1.xpose.msra.mxu0 0.0
        %1431 = vmatprep.subr.mxu0 0.0
        %1432 = vmatpush1.xpose.msra.mxu0 0.0
        %1433 = vmatprep.subr.mxu0 0.0
        %1434 = vmatpush1.xpose.msra.mxu0 0.0
        %1435 = vmatprep.subr.mxu0 0.0
        %1436 = vmatpush1.xpose.msra.mxu0 0.0
        %1437 = vmatprep.subr.mxu0 0.0
        %1438 = vmatpush1.xpose.msra.mxu0 0.0
        %1439 = vmatprep.subr.mxu0 0.0
        %1440 = vmatpush1.xpose.msra.mxu0 0.0
        %1441 = vmatprep.subr.mxu0 0.0
        %1442 = vmatpush1.xpose.msra.mxu0 0.0
        %1443 = vmatprep.subr.mxu0 0.0
        %1444 = vmatpush1.xpose.msra.mxu0 0.0
        %1445 = vmatprep.subr.mxu0 0.0
        %1446 = vmatpush1.xpose.msra.mxu0 0.0
        %1447 = vmatprep.subr.mxu0 0.0
        %1448 = vmatpush1.xpose.msra.mxu0 0.0
        %1449 = vmatprep.subr.mxu0 0.0
        %1450 = vmatpush1.xpose.msra.mxu0 0.0
        %1451 = vmatprep.subr.mxu0 0.0
        %1452 = vmatpush1.xpose.msra.mxu0 0.0
        %1453 = vmatprep.subr.mxu0 0.0
        %1454 = vmatpush1.xpose.msra.mxu0 0.0
        %1455 = vmatprep.subr.mxu0 0.0
        %1456 = vmatpush1.xpose.msra.mxu0 0.0
        %1457 = vmatprep.subr.mxu0 0.0
        %1458 = vmatpush1.xpose.msra.mxu0 0.0
        %1459 = vmatprep.subr.mxu0 0.0
        %1460 = vmatpush1.xpose.msra.mxu0 0.0
        %1461 = vmatprep.subr.mxu0 0.0
        %1462 = vmatpush1.xpose.msra.mxu0 0.0
        %1463 = vmatprep.subr.mxu0 0.0
        %1464 = vmatpush1.xpose.msra.mxu0 0.0
        %1465 = vmatprep.subr.mxu0 0.0
        %1466 = vmatpush1.xpose.msra.mxu0 0.0
        %1467 = vmatprep.subr.mxu0 0.0
        %1468 = vmatpush1.xpose.msra.mxu0 0.0
        %1469 = vmatprep.subr.mxu0 0.0
        %1470 = vmatpush1.xpose.msra.mxu0 0.0
        %1471 = vmatprep.subr.mxu0 0.0
        %1472 = vmatpush1.xpose.msra.mxu0 0.0
        %1473 = vmatprep.subr.mxu0 0.0
        %1474 = vmatpush1.xpose.msra.mxu0 0.0
        %1475 = vmatprep.subr.mxu0 0.0
        %1476 = vmatpush1.xpose.msra.mxu0 0.0
        %1477 = vmatprep.subr.mxu0 0.0
        %1478 = vmatpush1.xpose.msra.mxu0 0.0
        %1479 = vmatprep.subr.mxu0 0.0
        %1480 = vmatpush1.xpose.msra.mxu0 0.0
        %1481 = vmatprep.mubr.f32.mxu0 0.0
        %1482 = vmatmul.mubr.f32.gmra.mrb[0].mxu0 %v1413
        %v1483 = vpop.f32.mrb[0].mxu0
        %v1484 = vadd.f32 0.0, %v1483
        %v1485 = vpop.f32.mrb[0].mxu0
        %1486 = vdwg.mxu0
        %v1487 = vsel %vm331, %v1484, -inf
        %1488 = vmax.xlane.f32.xlu0 %v1487
        %v1489 = vpop.xlane.xlu0 %1488
        %v1490 = vsub.f32 %v1484, %v1489
        %v1491 = vmul.f32 %v1490, 1.442695
        %v1492 = vpow.pop %v1491
        %v1493 = vsel %vm331, %v1492, 0.0
        %1494 = vadd.xlane.f32.xlu0 %v1493
        %v1495 = vpop.xlane.xlu0 %1494
        %v1496 = vrcp.pop %v1495
        %v1497 = vmul.f32 %v1492, %v1496
        %1498 = vrot.lane.b32.xlu0 %v250, 36
        %v1499 = vpop.permute.xlu0 %1498
        %v1502 = vsel %vm331, %v1497, 0
        %1504 = vmatprep.subr.mxu0 0.0
        %1505 = vmatpush1.msra.mxu0 %v1499
        %1506 = vmatprep.subr.mxu0 0.0
        %1507 = vmatpush1.msra.mxu0 0.0
        %1508 = vmatprep.subr.mxu0 0.0
        %1509 = vmatpush1.msra.mxu0 0.0
        %1510 = vmatprep.subr.mxu0 0.0
        %1511 = vmatpush1.msra.mxu0 0.0
        %1512 = vmatprep.subr.mxu0 0.0
        %1513 = vmatpush1.msra.mxu0 0.0
        %1514 = vmatprep.subr.mxu0 0.0
        %1515 = vmatpush1.msra.mxu0 0.0
        %1516 = vmatprep.subr.mxu0 0.0
        %1517 = vmatpush1.msra.mxu0 0.0
        %1518 = vmatprep.subr.mxu0 0.0
        %1519 = vmatpush1.msra.mxu0 0.0
        %1520 = vmatprep.subr.mxu0 0.0
        %1521 = vmatpush1.msra.mxu0 0.0
        %1522 = vmatprep.subr.mxu0 0.0
        %1523 = vmatpush1.msra.mxu0 0.0
        %1524 = vmatprep.subr.mxu0 0.0
        %1525 = vmatpush1.msra.mxu0 0.0
        %1526 = vmatprep.subr.mxu0 0.0
        %1527 = vmatpush1.msra.mxu0 0.0
        %1528 = vmatprep.subr.mxu0 0.0
        %1529 = vmatpush1.msra.mxu0 0.0
        %1530 = vmatprep.subr.mxu0 0.0
        %1531 = vmatpush1.msra.mxu0 0.0
        %1532 = vmatprep.subr.mxu0 0.0
        %1533 = vmatpush1.msra.mxu0 0.0
        %1534 = vmatprep.subr.mxu0 0.0
        %1535 = vmatpush1.msra.mxu0 0.0
        %1536 = vmatprep.subr.mxu0 0.0
        %1537 = vmatpush1.msra.mxu0 0.0
        %1538 = vmatprep.subr.mxu0 0.0
        %1539 = vmatpush1.msra.mxu0 0.0
        %1540 = vmatprep.subr.mxu0 0.0
        %1541 = vmatpush1.msra.mxu0 0.0
        %1542 = vmatprep.subr.mxu0 0.0
        %1543 = vmatpush1.msra.mxu0 0.0
        %1544 = vmatprep.subr.mxu0 0.0
        %1545 = vmatpush1.msra.mxu0 0.0
        %1546 = vmatprep.subr.mxu0 0.0
        %1547 = vmatpush1.msra.mxu0 0.0
        %1548 = vmatprep.subr.mxu0 0.0
        %1549 = vmatpush1.msra.mxu0 0.0
        %1550 = vmatprep.subr.mxu0 0.0
        %1551 = vmatpush1.msra.mxu0 0.0
        %1552 = vmatprep.subr.mxu0 0.0
        %1553 = vmatpush1.msra.mxu0 0.0
        %1554 = vmatprep.subr.mxu0 0.0
        %1555 = vmatpush1.msra.mxu0 0.0
        %1556 = vmatprep.subr.mxu0 0.0
        %1557 = vmatpush1.msra.mxu0 0.0
        %1558 = vmatprep.subr.mxu0 0.0
        %1559 = vmatpush1.msra.mxu0 0.0
        %1560 = vmatprep.subr.mxu0 0.0
        %1561 = vmatpush1.msra.mxu0 0.0
        %1562 = vmatprep.subr.mxu0 0.0
        %1563 = vmatpush1.msra.mxu0 0.0
        %1564 = vmatprep.subr.mxu0 0.0
        %1565 = vmatpush1.msra.mxu0 0.0
        %1566 = vmatprep.subr.mxu0 0.0
        %1567 = vmatpush1.msra.mxu0 0.0
        %1568 = vmatprep.mubr.f32.mxu0 0.0
        %1569 = vmatmul.mubr.f32.gmra.mrb[0].mxu0 %v1502
        %v1570 = vpop.f32.mrb[0].mxu0
        %v1571 = vadd.f32 0.0, %v1570
        %v1572 = vpop.f32.mrb[0].mxu0
        %1573 = vdwg.mxu0
        %1575 = vrot.lane.b32.xlu0 %v581, 4
        %v1576 = vpop.permute.xlu0 %1575
        %1579 = vrot.lane.b32.xlu0 %v746, 8
        %v1580 = vpop.permute.xlu0 %1579
        %1583 = vrot.lane.b32.xlu0 %v911, 12
        %v1584 = vpop.permute.xlu0 %1583
        %1587 = vrot.lane.b32.xlu0 %v1076, 16
        %v1588 = vpop.permute.xlu0 %1587
        %1591 = vrot.lane.b32.xlu0 %v1241, 20
        %v1592 = vpop.permute.xlu0 %1591
        %1595 = vrot.lane.b32.xlu0 %v1406, 24
        %v1596 = vpop.permute.xlu0 %1595
        %1599 = vrot.lane.b32.xlu0 %v1571, 28
        %v1600 = vpop.permute.xlu0 %1599
        %v1602 = vsel %vm256, %v416, %v1576
        %v1603 = vsel %vm331, %v1602, %v1580
        %vm1604 = vcmask 97280
        %v1605 = vsel %vm1604, %v1603, %v1584
        %vm1606 = vcmask 130048
        %v1607 = vsel %vm1606, %v1605, %v1588
        %vm1608 = vcmask 162816
        %v1609 = vsel %vm1608, %v1607, %v1592
        %vm1610 = vcmask 195584
        %v1611 = vsel %vm1610, %v1609, %v1596
        %vm1612 = vcmask 228352
        %v1613 = vsel %vm1612, %v1611, %v1600
        %1614 = vst.msk [vmem:[%s173] sm:$0xff] %vm179, %v1613
        %s1615 = sand.u32 %s75, 1
        %s1616 = scalar_lea.sflag [#allocation4], %s1615
        %s1617 = sand.u32 %s75, 1
        %s1618 = smul.addr %s1617, 8
        %s1619 = scalar_lea.vmem [#allocation7], %s1618
        // Predicated region
        $region37: #{tpu_custom_call.1} parent=27 // pred_check
          %p1620 = pneg %p85
        $region38: #{tpu_custom_call.1} parent=27 // pred_check_branch
          %1622 = sbr.rel (%p1620) target = $region40
        $region39: #{tpu_custom_call.1} parent=27 // pred_region
          %s1624 = ssub.s32 128, 128
          %1625 = vsyncadd %s1616, %s1624
          %s1626 = smul.addr %s20, 128
          %s1627 = scalar_lea.hbm %s2, %s1626
          %s1629 = sshll.u32 %s1619, 4
          %s1630 = int_to_ptr.vmem [resolvable:$true] %s1629
          %1632 = dma.vmem_to_hbm [thread:$0]  %s1630, 128, %s1627, %s1616
        $region40: #{tpu_custom_call.1} parent=27 // pred_fallthru
          _
      $region28: #{tpu_custom_call.1} parent=5 // pred_fallthru
        _
      %p1633 = scmp.le.s32.totalorder 2, %s15
      // Predicated region
      $region41: #{tpu_custom_call.1} parent=5 // pred_check
        %p1634 = pneg %p1633
      $region42: #{tpu_custom_call.1} parent=5 // pred_check_branch
        %1636 = sbr.rel (%p1634) target = $region44
      $region43: #{tpu_custom_call.1} parent=5 // pred_region
        %s1637 = ssub.s32 %s15, 2
        // Predicated region
        $region45: #{tpu_custom_call.1} parent=43 // pred_check
          %p1638 = pneg %p91
        $region46: #{tpu_custom_call.1} parent=43 // pred_check_branch
          %1640 = sbr.rel (%p1638) target = $region48
        $region47: #{tpu_custom_call.1} parent=43 // pred_region
          %s1641 = sand.u32 %s76, 1
          %s1642 = scalar_lea.sflag [#allocation4], %s1641
          %s1643 = sand.u32 %s76, 1
          %s1644 = smul.addr %s1643, 8
          %s1645 = scalar_lea.vmem [#allocation7], %s1644
          %1646 = dma.done %s1642, 128
        $region48: #{tpu_custom_call.1} parent=43 // pred_fallthru
          _
      $region44: #{tpu_custom_call.1} parent=5 // pred_fallthru
        _
    $region6: #{tpu_custom_call.1} parent=1 // loop_footer
      %s19 = sadd.s32 1, %s15
    $region7: #{tpu_custom_call.1} parent=1 // loop_footer_branch
      %14 = sbr.rel target = $region3
    $region8: #{tpu_custom_call.1} parent=1 // loop_exit
      _
    %1647 = vsyncpa [#allocation3], 1
    %s1648 = scalar_lea.sflag [#allocation3], 1
    %1649 = vsyncpa %s1648, 1
    %1650 = vsyncpa [#allocation6], 1
    %1651 = vsyncpa [#allocation4], 1
    %s1652 = scalar_lea.sflag [#allocation4], 1
    %1653 = vsyncpa %s1652, 1

</llo_original>
